<compile_context>
chip_gen: v7x
topology: tpu7x:2x2x1
jax: 0.10.0
libtpu: 0.0.40
codegen_flags: <defaults>
</compile_context>

<pallas_src>
import functools
import math

import jax
import jax.numpy as jnp
from jax import lax
from jax.experimental import pallas as pl
from jax.experimental.pallas import tpu as pltpu


def _attention_kernel(x_ref, wqkv_ref, bqkv_ref, wo_ref, bo_ref, wl_ref, bl_ref,
                      o_ref, *, num_heads):
    Bb, S, E = x_ref.shape
    H = num_heads
    hd = E // H
    M = Bb * S
    G = H * Bb
    cdt = wqkv_ref.dtype                     # matmul input dtype (bf16); f32 accum

    # ---- fused QKV projection: one lane-dense (M,E) @ (E,3E) matmul ------------
    x2 = x_ref[...].reshape(M, E)            # merges leading dims only (layout-free)
    qkv = jnp.dot(x2.astype(cdt), wqkv_ref[...],
                  preferred_element_type=jnp.float32) + bqkv_ref[...]   # (M,3E) f32

    # ---- split into (head, batch)-grouped q/k/v --------------------------------
    # Static lane slices + stack along a new leading axis; the reshape below only
    # splits/merges leading dims.  Avoids sublane transposes / lane-split reshapes.
    def heads(base):
        hs = [qkv[:, base + h * hd: base + (h + 1) * hd] for h in range(H)]
        return jnp.stack(hs, axis=0).reshape(G, S, hd)        # (H*Bb, S, hd)

    q = heads(0)              # softmax scale already folded into wqkv / bqkv
    k = heads(E)
    v = heads(2 * E)

    # ---- attention, batched over (head, batch) groups --------------------------
    s = lax.dot_general(q.astype(cdt), k.astype(cdt),
                        (((2,), (2,)), ((0,), (0,))),
                        preferred_element_type=jnp.float32)   # (G, S, S)
    s = s - jnp.max(s, axis=-1, keepdims=True)                # f32 softmax
    p = jnp.exp(s)
    p = p * pl.reciprocal(jnp.sum(p, axis=-1, keepdims=True), approx=True)

    ctx = lax.dot_general(p.astype(cdt), v.astype(cdt),
                          (((2,), (1,)), ((0,), (0,))),
                          preferred_element_type=jnp.float32)  # (G, S, hd)

    # ---- regroup heads onto the lane dim -> single (M,E)@(E,E) out-projection ---
    ctx_h = ctx.reshape(H, M, hd)                              # leading-dim reshape
    ctx2 = jnp.concatenate([ctx_h[h] for h in range(H)], axis=-1)        # (M, E)
    attn = jnp.dot(ctx2.astype(cdt), wo_ref[...],
                   preferred_element_type=jnp.float32) + bo_ref[...]     # (M, E)

    # ---- channel-reduction linear, lane-dense (padded) output store ------------
    y = jnp.dot(attn.astype(cdt), wl_ref[...],
                preferred_element_type=jnp.float32) + bl_ref[...]        # (M, E_pad)
    o_ref[...] = y.reshape(Bb, S, o_ref.shape[-1]).astype(o_ref.dtype)


def channel_reduction_attention(x, params, num_heads, *,
                                compute_dtype=jnp.bfloat16):
    """x: (B, S, E) float32.  Returns (B, S, E_new) matching the PyTorch module."""
    B, S, E = x.shape
    H = num_heads
    hd = E // H
    E_new = params["lin_w"].shape[1]
    # Lane-dense output store: pad E_new up to a multiple of 128.  At production
    # sizes E_new is typically already a multiple of 128 -> no pad and no un-pad.
    E_pad = ((E_new + 127) // 128) * 128
    scale = 1.0 / math.sqrt(hd)

    # ---- host-side weight prep (one-time layout plumbing) ----------------------
    wqkv = jnp.concatenate([params["wq"] * scale, params["wk"], params["wv"]],
                           axis=1).astype(compute_dtype)               # (E, 3E)
    bqkv = jnp.concatenate([params["bq"] * scale, params["bk"], params["bv"]],
                           axis=1)                                      # (1, 3E) f32
    wo = params["wo"].astype(compute_dtype)                             # (E, E)
    bo = params["bo"]                                                   # (1, E) f32
    wl = jnp.pad(params["lin_w"],
                 ((0, 0), (0, E_pad - E_new))).astype(compute_dtype)    # (E, E_pad)
    bl = jnp.pad(params["lin_b"], ((0, 0), (0, E_pad - E_new)))         # (1, E_pad)

    # ---- batch blocking ---------------------------------------------------------
    # Largest B_blk whose row count (B_blk*S) stays under the cap, preferring a
    # grid length >= 2 so v7x can shard across its 2 TensorCores (and the DMA
    # pipeline has >1 step to overlap).
    ROW_CAP = 512
    divs = [d for d in range(1, B + 1) if B % d == 0 and d * S <= ROW_CAP] or [1]
    multi = [d for d in divs if B // d >= 2]
    B_blk = max(multi) if multi else max(divs)
    grid = (B // B_blk,)

    # ---- VMEM budget: ~75% of physical, capped at 96 MiB ------------------------
    try:
        vmem_cap = pltpu.get_tpu_info().vmem_capacity_bytes
    except Exception:
        vmem_cap = 64 * 1024 * 1024
    vmem_limit = min(int(vmem_cap) * 3 // 4, 96 * 1024 * 1024)

    kernel = functools.partial(_attention_kernel, num_heads=H)

    def build(single_buffer_weights):
        def wspec(shape):
            im = lambda b: (0,) * len(shape)
            if single_buffer_weights:
                return pl.BlockSpec(shape, im, pipeline_mode=pl.Buffered(1))
            return pl.BlockSpec(shape, im)

        return pl.pallas_call(
            kernel,
            out_shape=jax.ShapeDtypeStruct((B, S, E_pad), x.dtype),
            grid_spec=pltpu.PrefetchScalarGridSpec(
                num_scalar_prefetch=0,
                grid=grid,
                in_specs=[
                    pl.BlockSpec((B_blk, S, E), lambda b: (b, 0, 0)),   # x
                    wspec((E, 3 * E)),       # wqkv (bf16, scale folded into Q cols)
                    wspec((1, 3 * E)),       # bqkv (f32)
                    wspec((E, E)),           # wo   (bf16)
                    wspec((1, E)),           # bo   (f32)
                    wspec((E, E_pad)),       # lin_w (bf16, zero-padded lanes)
                    wspec((1, E_pad)),       # lin_b (f32, zero-padded lanes)
                ],
                out_specs=pl.BlockSpec((B_blk, S, E_pad), lambda b: (b, 0, 0)),
            ),
            compiler_params=pltpu.CompilerParams(
                dimension_semantics=("parallel",),
                vmem_limit_bytes=vmem_limit,
            ),
        )

    args = (x, wqkv, bqkv, wo, bo, wl, bl)
    try:
        out_pad = build(True)(*args)          # single-buffered constant weights
    except Exception:
        out_pad = build(False)(*args)         # fallback: default double buffering

    if E_pad == E_new:
        return out_pad
    # TODO(synk): at production sizes keep E_new a multiple of 128 so this
    # wrapper-side un-pad slice (an extra full HBM pass) disappears.
    return out_pad[..., :E_new]


def init_params(key, num_channels, new_num_channels):
    """Synthetic parameters matching nn.MultiheadAttention + nn.Linear shapes.
    All projection weights stored TRANSPOSED (in_features, out_features) so the
    math is x @ W."""
    E, En = num_channels, new_num_channels
    ks = jax.random.split(key, 10)
    sc = 1.0 / math.sqrt(E)
    u = lambda k, shape: jax.random.uniform(k, shape, jnp.float32, -sc, sc)
    return {
        "wq": u(ks[0], (E, E)), "bq": u(ks[1], (1, E)),
        "wk": u(ks[2], (E, E)), "bk": u(ks[3], (1, E)),
        "wv": u(ks[4], (E, E)), "bv": u(ks[5], (1, E)),
        "wo": u(ks[6], (E, E)), "bo": u(ks[7], (1, E)),
        "lin_w": u(ks[8], (E, En)), "lin_b": u(ks[9], (1, En)),
    }


def reference(x, params, num_heads):
    """Pure-JAX f32 reference reproducing torch.nn.MultiheadAttention + Linear."""
    B, S, E = x.shape
    hd = E // num_heads
    q = x @ params["wq"] + params["bq"]
    k = x @ params["wk"] + params["bk"]
    v = x @ params["wv"] + params["bv"]
    q = q.reshape(B, S, num_heads, hd).transpose(0, 2, 1, 3)
    k = k.reshape(B, S, num_heads, hd).transpose(0, 2, 1, 3)
    v = v.reshape(B, S, num_heads, hd).transpose(0, 2, 1, 3)
    s = jnp.einsum("bhqd,bhkd->bhqk", q, k) / math.sqrt(hd)
    p = jax.nn.softmax(s, axis=-1)
    ctx = jnp.einsum("bhqk,bhkd->bhqd", p, v).transpose(0, 2, 1, 3).reshape(B, S, E)
    attn_out = ctx @ params["wo"] + params["bo"]
    return attn_out @ params["lin_w"] + params["lin_b"]


if __name__ == "__main__":
    B, S = 2, 8
    num_channels, num_heads, new_num_channels = 32, 4, 16

    key = jax.random.PRNGKey(0)
    kx, kp = jax.random.split(key)
    x = jax.random.normal(kx, (B, S, num_channels), jnp.float32)
    params = init_params(kp, num_channels, new_num_channels)

    out = channel_reduction_attention(x, params, num_heads)
    out = jax.block_until_ready(out)

    ref = reference(x, params, num_heads)
    assert out.shape == (B, S, new_num_channels)
    # tolerance covers bf16 matmul inputs (f32 accum) + approximate EUP reciprocal
    assert jnp.allclose(out, ref, atol=3e-2, rtol=3e-2), "mismatch vs reference"

    print("KERNEL_OK")
</pallas_src>

<mosaic_0001>
module attributes {stable_mosaic.version = 11 : i64} {
  func.func @_attention_kernel(%arg0: i32, %arg1: memref<1x8x32xf32, #tpu.memory_space<vmem>>, %arg2: memref<32x96xbf16, #tpu.memory_space<vmem>>, %arg3: memref<1x96xf32, #tpu.memory_space<vmem>>, %arg4: memref<32x32xbf16, #tpu.memory_space<vmem>>, %arg5: memref<1x32xf32, #tpu.memory_space<vmem>>, %arg6: memref<32x128xbf16, #tpu.memory_space<vmem>>, %arg7: memref<1x128xf32, #tpu.memory_space<vmem>>, %arg8: memref<1x8x128xf32, #tpu.memory_space<vmem>>) attributes {dimension_semantics = [#tpu.dimension_semantics<parallel>], iteration_bounds = array<i64: 2>, scalar_prefetch = 0 : i64, scratch_operands = 0 : i64, tpu.core_type = #tpu.core_type<tc>, window_params = [{transform_indices = @transform_0, window_bounds = array<i64: 1, 8, 32>}, {pipeline_mode = #tpu.pipeline_mode<synchronous>, transform_indices = @transform_1, window_bounds = array<i64: 32, 96>}, {pipeline_mode = #tpu.pipeline_mode<synchronous>, transform_indices = @transform_2, window_bounds = array<i64: 1, 96>}, {pipeline_mode = #tpu.pipeline_mode<synchronous>, transform_indices = @transform_3, window_bounds = array<i64: 32, 32>}, {pipeline_mode = #tpu.pipeline_mode<synchronous>, transform_indices = @transform_4, window_bounds = array<i64: 1, 32>}, {pipeline_mode = #tpu.pipeline_mode<synchronous>, transform_indices = @transform_5, window_bounds = array<i64: 32, 128>}, {pipeline_mode = #tpu.pipeline_mode<synchronous>, transform_indices = @transform_6, window_bounds = array<i64: 1, 128>}, {transform_indices = @transform_7, window_bounds = array<i64: 1, 8, 128>}]} {
    %c0 = arith.constant 0 : index
    %c0_0 = arith.constant 0 : index
    %c0_1 = arith.constant 0 : index
    %0 = vector.load %arg1[%c0, %c0_0, %c0_1] : memref<1x8x32xf32, #tpu.memory_space<vmem>>, vector<1x8x32xf32>
    %1 = vector.shape_cast %0 : vector<1x8x32xf32> to vector<8x32xf32>
    %2 = arith.truncf %1 : vector<8x32xf32> to vector<8x32xbf16>
    %c0_2 = arith.constant 0 : index
    %c0_3 = arith.constant 0 : index
    %3 = vector.load %arg2[%c0_2, %c0_3] : memref<32x96xbf16, #tpu.memory_space<vmem>>, vector<32x96xbf16>
    %cst = arith.constant dense<0.000000e+00> : vector<8x96xf32>
    %4 = tpu.matmul %2, %3, %cst {dimension_numbers = #tpu.dot_dimension_numbers<[1], [0], [0], [1], [0, 0, 1, 1], [], []>} : vector<8x32xbf16>, vector<32x96xbf16>, vector<8x96xf32> -> vector<8x96xf32>
    %c0_4 = arith.constant 0 : index
    %c0_5 = arith.constant 0 : index
    %5 = vector.load %arg3[%c0_4, %c0_5] : memref<1x96xf32, #tpu.memory_space<vmem>>, vector<1x96xf32>
    %6 = vector.broadcast %5 : vector<1x96xf32> to vector<8x96xf32>
    %7 = arith.addf %4, %6 : vector<8x96xf32>
    %8 = vector.extract_strided_slice %7 {offsets = [0, 0], sizes = [8, 8], strides = [1, 1]} : vector<8x96xf32> to vector<8x8xf32>
    %9 = vector.extract_strided_slice %7 {offsets = [0, 8], sizes = [8, 8], strides = [1, 1]} : vector<8x96xf32> to vector<8x8xf32>
    %10 = vector.extract_strided_slice %7 {offsets = [0, 16], sizes = [8, 8], strides = [1, 1]} : vector<8x96xf32> to vector<8x8xf32>
    %11 = vector.extract_strided_slice %7 {offsets = [0, 24], sizes = [8, 8], strides = [1, 1]} : vector<8x96xf32> to vector<8x8xf32>
    %12 = vector.shape_cast %8 : vector<8x8xf32> to vector<1x8x8xf32>
    %13 = vector.shape_cast %9 : vector<8x8xf32> to vector<1x8x8xf32>
    %14 = vector.shape_cast %10 : vector<8x8xf32> to vector<1x8x8xf32>
    %15 = vector.shape_cast %11 : vector<8x8xf32> to vector<1x8x8xf32>
    %16 = tpu.concatenate %12, %13, %14, %15 in 0 : vector<1x8x8xf32>, vector<1x8x8xf32>, vector<1x8x8xf32>, vector<1x8x8xf32> -> vector<4x8x8xf32>
    %17 = vector.extract_strided_slice %7 {offsets = [0, 32], sizes = [8, 8], strides = [1, 1]} : vector<8x96xf32> to vector<8x8xf32>
    %18 = vector.extract_strided_slice %7 {offsets = [0, 40], sizes = [8, 8], strides = [1, 1]} : vector<8x96xf32> to vector<8x8xf32>
    %19 = vector.extract_strided_slice %7 {offsets = [0, 48], sizes = [8, 8], strides = [1, 1]} : vector<8x96xf32> to vector<8x8xf32>
    %20 = vector.extract_strided_slice %7 {offsets = [0, 56], sizes = [8, 8], strides = [1, 1]} : vector<8x96xf32> to vector<8x8xf32>
    %21 = vector.shape_cast %17 : vector<8x8xf32> to vector<1x8x8xf32>
    %22 = vector.shape_cast %18 : vector<8x8xf32> to vector<1x8x8xf32>
    %23 = vector.shape_cast %19 : vector<8x8xf32> to vector<1x8x8xf32>
    %24 = vector.shape_cast %20 : vector<8x8xf32> to vector<1x8x8xf32>
    %25 = tpu.concatenate %21, %22, %23, %24 in 0 : vector<1x8x8xf32>, vector<1x8x8xf32>, vector<1x8x8xf32>, vector<1x8x8xf32> -> vector<4x8x8xf32>
    %26 = vector.extract_strided_slice %7 {offsets = [0, 64], sizes = [8, 8], strides = [1, 1]} : vector<8x96xf32> to vector<8x8xf32>
    %27 = vector.extract_strided_slice %7 {offsets = [0, 72], sizes = [8, 8], strides = [1, 1]} : vector<8x96xf32> to vector<8x8xf32>
    %28 = vector.extract_strided_slice %7 {offsets = [0, 80], sizes = [8, 8], strides = [1, 1]} : vector<8x96xf32> to vector<8x8xf32>
    %29 = vector.extract_strided_slice %7 {offsets = [0, 88], sizes = [8, 8], strides = [1, 1]} : vector<8x96xf32> to vector<8x8xf32>
    %30 = vector.shape_cast %26 : vector<8x8xf32> to vector<1x8x8xf32>
    %31 = vector.shape_cast %27 : vector<8x8xf32> to vector<1x8x8xf32>
    %32 = vector.shape_cast %28 : vector<8x8xf32> to vector<1x8x8xf32>
    %33 = vector.shape_cast %29 : vector<8x8xf32> to vector<1x8x8xf32>
    %34 = tpu.concatenate %30, %31, %32, %33 in 0 : vector<1x8x8xf32>, vector<1x8x8xf32>, vector<1x8x8xf32>, vector<1x8x8xf32> -> vector<4x8x8xf32>
    %35 = arith.truncf %16 : vector<4x8x8xf32> to vector<4x8x8xbf16>
    %36 = arith.truncf %25 : vector<4x8x8xf32> to vector<4x8x8xbf16>
    %cst_6 = arith.constant dense<0.000000e+00> : vector<4x8x8xf32>
    %37 = tpu.matmul %35, %36, %cst_6 {dimension_numbers = #tpu.dot_dimension_numbers<[2], [2], [1], [1], [0, 0, 0, 1, 1, 1], [0], [0]>} : vector<4x8x8xbf16>, vector<4x8x8xbf16>, vector<4x8x8xf32> -> vector<4x8x8xf32>
    %cst_7 = arith.constant dense<0xFF800000> : vector<4x8xf32>
    %38 = vector.multi_reduction <maximumf>, %37, %cst_7 [2] : vector<4x8x8xf32> to vector<4x8xf32>
    %39 = vector.shape_cast %38 : vector<4x8xf32> to vector<4x8x1xf32>
    %40 = vector.broadcast %39 : vector<4x8x1xf32> to vector<4x8x8xf32>
    %41 = arith.subf %37, %40 : vector<4x8x8xf32>
    %42 = math.exp %41 : vector<4x8x8xf32>
    %cst_8 = arith.constant dense<0.000000e+00> : vector<4x8xf32>
    %43 = vector.multi_reduction <add>, %42, %cst_8 [2] : vector<4x8x8xf32> to vector<4x8xf32>
    %44 = vector.shape_cast %43 : vector<4x8xf32> to vector<4x8x1xf32>
    %45 = tpu.reciprocal %44 {approx = true} : vector<4x8x1xf32> -> vector<4x8x1xf32>
    %46 = vector.broadcast %45 : vector<4x8x1xf32> to vector<4x8x8xf32>
    %47 = arith.mulf %42, %46 : vector<4x8x8xf32>
    %48 = arith.truncf %47 : vector<4x8x8xf32> to vector<4x8x8xbf16>
    %49 = arith.truncf %34 : vector<4x8x8xf32> to vector<4x8x8xbf16>
    %cst_9 = arith.constant dense<0.000000e+00> : vector<4x8x8xf32>
    %50 = tpu.matmul %48, %49, %cst_9 {dimension_numbers = #tpu.dot_dimension_numbers<[2], [1], [1], [2], [0, 0, 0, 1, 1, 2], [0], [0]>} : vector<4x8x8xbf16>, vector<4x8x8xbf16>, vector<4x8x8xf32> -> vector<4x8x8xf32>
    %51 = vector.extract_strided_slice %50 {offsets = [0, 0, 0], sizes = [1, 8, 8], strides = [1, 1, 1]} : vector<4x8x8xf32> to vector<1x8x8xf32>
    %52 = vector.shape_cast %51 : vector<1x8x8xf32> to vector<8x8xf32>
    %53 = vector.extract_strided_slice %50 {offsets = [1, 0, 0], sizes = [1, 8, 8], strides = [1, 1, 1]} : vector<4x8x8xf32> to vector<1x8x8xf32>
    %54 = vector.shape_cast %53 : vector<1x8x8xf32> to vector<8x8xf32>
    %55 = vector.extract_strided_slice %50 {offsets = [2, 0, 0], sizes = [1, 8, 8], strides = [1, 1, 1]} : vector<4x8x8xf32> to vector<1x8x8xf32>
    %56 = vector.shape_cast %55 : vector<1x8x8xf32> to vector<8x8xf32>
    %57 = vector.extract_strided_slice %50 {offsets = [3, 0, 0], sizes = [1, 8, 8], strides = [1, 1, 1]} : vector<4x8x8xf32> to vector<1x8x8xf32>
    %58 = vector.shape_cast %57 : vector<1x8x8xf32> to vector<8x8xf32>
    %59 = tpu.concatenate %52, %54, %56, %58 in 1 : vector<8x8xf32>, vector<8x8xf32>, vector<8x8xf32>, vector<8x8xf32> -> vector<8x32xf32>
    %60 = arith.truncf %59 : vector<8x32xf32> to vector<8x32xbf16>
    %c0_10 = arith.constant 0 : index
    %c0_11 = arith.constant 0 : index
    %61 = vector.load %arg4[%c0_10, %c0_11] : memref<32x32xbf16, #tpu.memory_space<vmem>>, vector<32x32xbf16>
    %cst_12 = arith.constant dense<0.000000e+00> : vector<8x32xf32>
    %62 = tpu.matmul %60, %61, %cst_12 {dimension_numbers = #tpu.dot_dimension_numbers<[1], [0], [0], [1], [0, 0, 1, 1], [], []>} : vector<8x32xbf16>, vector<32x32xbf16>, vector<8x32xf32> -> vector<8x32xf32>
    %c0_13 = arith.constant 0 : index
    %c0_14 = arith.constant 0 : index
    %63 = vector.load %arg5[%c0_13, %c0_14] : memref<1x32xf32, #tpu.memory_space<vmem>>, vector<1x32xf32>
    %64 = vector.broadcast %63 : vector<1x32xf32> to vector<8x32xf32>
    %65 = arith.addf %62, %64 : vector<8x32xf32>
    %66 = arith.truncf %65 : vector<8x32xf32> to vector<8x32xbf16>
    %c0_15 = arith.constant 0 : index
    %c0_16 = arith.constant 0 : index
    %67 = vector.load %arg6[%c0_15, %c0_16] : memref<32x128xbf16, #tpu.memory_space<vmem>>, vector<32x128xbf16>
    %cst_17 = arith.constant dense<0.000000e+00> : vector<8x128xf32>
    %68 = tpu.matmul %66, %67, %cst_17 {dimension_numbers = #tpu.dot_dimension_numbers<[1], [0], [0], [1], [0, 0, 1, 1], [], []>} : vector<8x32xbf16>, vector<32x128xbf16>, vector<8x128xf32> -> vector<8x128xf32>
    %c0_18 = arith.constant 0 : index
    %c0_19 = arith.constant 0 : index
    %69 = vector.load %arg7[%c0_18, %c0_19] : memref<1x128xf32, #tpu.memory_space<vmem>>, vector<1x128xf32>
    %70 = vector.broadcast %69 : vector<1x128xf32> to vector<8x128xf32>
    %71 = arith.addf %68, %70 : vector<8x128xf32>
    %72 = vector.shape_cast %71 : vector<8x128xf32> to vector<1x8x128xf32>
    %c0_20 = arith.constant 0 : index
    %c0_21 = arith.constant 0 : index
    %c0_22 = arith.constant 0 : index
    %73 = vector.load %arg8[%c0_20, %c0_21, %c0_22] : memref<1x8x128xf32, #tpu.memory_space<vmem>>, vector<1x8x128xf32>
    tpu.vector_store %arg8[%c0_20, %c0_21, %c0_22], %72 {strides = array<i32>} : memref<1x8x128xf32, #tpu.memory_space<vmem>>, vector<1x8x128xf32>,
    return
  }
  func.func @transform_0(%arg0: i32) -> (i32, i32, i32) {
    %c0_i32 = arith.constant 0 : i32
    %c0_i32_0 = arith.constant 0 : i32
    %c0_i32_1 = arith.constant 0 : i32
    return %arg0, %c0_i32, %c0_i32_0 : i32, i32, i32
  }
  func.func @transform_1(%arg0: i32) -> (i32, i32) {
    %c0_i32 = arith.constant 0 : i32
    %c0_i32_0 = arith.constant 0 : i32
    %c0_i32_1 = arith.constant 0 : i32
    return %c0_i32, %c0_i32_0 : i32, i32
  }
  func.func @transform_2(%arg0: i32) -> (i32, i32) {
    %c0_i32 = arith.constant 0 : i32
    %c0_i32_0 = arith.constant 0 : i32
    %c0_i32_1 = arith.constant 0 : i32
    return %c0_i32, %c0_i32_0 : i32, i32
  }
  func.func @transform_3(%arg0: i32) -> (i32, i32) {
    %c0_i32 = arith.constant 0 : i32
    %c0_i32_0 = arith.constant 0 : i32
    %c0_i32_1 = arith.constant 0 : i32
    return %c0_i32, %c0_i32_0 : i32, i32
  }
  func.func @transform_4(%arg0: i32) -> (i32, i32) {
    %c0_i32 = arith.constant 0 : i32
    %c0_i32_0 = arith.constant 0 : i32
    %c0_i32_1 = arith.constant 0 : i32
    return %c0_i32, %c0_i32_0 : i32, i32
  }
  func.func @transform_5(%arg0: i32) -> (i32, i32) {
    %c0_i32 = arith.constant 0 : i32
    %c0_i32_0 = arith.constant 0 : i32
    %c0_i32_1 = arith.constant 0 : i32
    return %c0_i32, %c0_i32_0 : i32, i32
  }
  func.func @transform_6(%arg0: i32) -> (i32, i32) {
    %c0_i32 = arith.constant 0 : i32
    %c0_i32_0 = arith.constant 0 : i32
    %c0_i32_1 = arith.constant 0 : i32
    return %c0_i32, %c0_i32_0 : i32, i32
  }
  func.func @transform_7(%arg0: i32) -> (i32, i32, i32) {
    %c0_i32 = arith.constant 0 : i32
    %c0_i32_0 = arith.constant 0 : i32
    %c0_i32_1 = arith.constant 0 : i32
    return %arg0, %c0_i32, %c0_i32_0 : i32, i32, i32
  }
}

module attributes {stable_mosaic.version = 11 : i64} {
  func.func @_attention_kernel(%arg0: i32, %arg1: memref<1x8x32xf32, #tpu.memory_space<vmem>>, %arg2: memref<32x96xbf16, #tpu.memory_space<vmem>>, %arg3: memref<1x96xf32, #tpu.memory_space<vmem>>, %arg4: memref<32x32xbf16, #tpu.memory_space<vmem>>, %arg5: memref<1x32xf32, #tpu.memory_space<vmem>>, %arg6: memref<32x128xbf16, #tpu.memory_space<vmem>>, %arg7: memref<1x128xf32, #tpu.memory_space<vmem>>, %arg8: memref<1x8x128xf32, #tpu.memory_space<vmem>>) attributes {dimension_semantics = [#tpu.dimension_semantics<parallel>], iteration_bounds = array<i64: 2>, scalar_prefetch = 0 : i64, scratch_operands = 0 : i64, tpu.core_type = #tpu.core_type<tc>, window_params = [{transform_indices = @transform_0, window_bounds = array<i64: 1, 8, 32>}, {pipeline_mode = #tpu.pipeline_mode<synchronous>, transform_indices = @transform_1, window_bounds = array<i64: 32, 96>}, {pipeline_mode = #tpu.pipeline_mode<synchronous>, transform_indices = @transform_2, window_bounds = array<i64: 1, 96>}, {pipeline_mode = #tpu.pipeline_mode<synchronous>, transform_indices = @transform_3, window_bounds = array<i64: 32, 32>}, {pipeline_mode = #tpu.pipeline_mode<synchronous>, transform_indices = @transform_4, window_bounds = array<i64: 1, 32>}, {pipeline_mode = #tpu.pipeline_mode<synchronous>, transform_indices = @transform_5, window_bounds = array<i64: 32, 128>}, {pipeline_mode = #tpu.pipeline_mode<synchronous>, transform_indices = @transform_6, window_bounds = array<i64: 1, 128>}, {transform_indices = @transform_7, window_bounds = array<i64: 1, 8, 128>}]} {
    %c0 = arith.constant 0 : index
    %c0_0 = arith.constant 0 : index
    %c0_1 = arith.constant 0 : index
    %0 = vector.load %arg1[%c0, %c0_0, %c0_1] : memref<1x8x32xf32, #tpu.memory_space<vmem>>, vector<1x8x32xf32>
    %1 = vector.shape_cast %0 : vector<1x8x32xf32> to vector<8x32xf32>
    %2 = arith.truncf %1 : vector<8x32xf32> to vector<8x32xbf16>
    %c0_2 = arith.constant 0 : index
    %c0_3 = arith.constant 0 : index
    %3 = vector.load %arg2[%c0_2, %c0_3] : memref<32x96xbf16, #tpu.memory_space<vmem>>, vector<32x96xbf16>
    %cst = arith.constant dense<0.000000e+00> : vector<8x96xf32>
    %4 = tpu.matmul %2, %3, %cst {dimension_numbers = #tpu.dot_dimension_numbers<[1], [0], [0], [1], [0, 0, 1, 1], [], []>} : vector<8x32xbf16>, vector<32x96xbf16>, vector<8x96xf32> -> vector<8x96xf32>
    %c0_4 = arith.constant 0 : index
    %c0_5 = arith.constant 0 : index
    %5 = vector.load %arg3[%c0_4, %c0_5] : memref<1x96xf32, #tpu.memory_space<vmem>>, vector<1x96xf32>
    %6 = vector.broadcast %5 : vector<1x96xf32> to vector<8x96xf32>
    %7 = arith.addf %4, %6 : vector<8x96xf32>
    %8 = vector.extract_strided_slice %7 {offsets = [0, 0], sizes = [8, 8], strides = [1, 1]} : vector<8x96xf32> to vector<8x8xf32>
    %9 = vector.extract_strided_slice %7 {offsets = [0, 8], sizes = [8, 8], strides = [1, 1]} : vector<8x96xf32> to vector<8x8xf32>
    %10 = vector.extract_strided_slice %7 {offsets = [0, 16], sizes = [8, 8], strides = [1, 1]} : vector<8x96xf32> to vector<8x8xf32>
    %11 = vector.extract_strided_slice %7 {offsets = [0, 24], sizes = [8, 8], strides = [1, 1]} : vector<8x96xf32> to vector<8x8xf32>
    %12 = vector.shape_cast %8 : vector<8x8xf32> to vector<1x8x8xf32>
    %13 = vector.shape_cast %9 : vector<8x8xf32> to vector<1x8x8xf32>
    %14 = vector.shape_cast %10 : vector<8x8xf32> to vector<1x8x8xf32>
    %15 = vector.shape_cast %11 : vector<8x8xf32> to vector<1x8x8xf32>
    %16 = tpu.concatenate %12, %13, %14, %15 in 0 : vector<1x8x8xf32>, vector<1x8x8xf32>, vector<1x8x8xf32>, vector<1x8x8xf32> -> vector<4x8x8xf32>
    %17 = vector.extract_strided_slice %7 {offsets = [0, 32], sizes = [8, 8], strides = [1, 1]} : vector<8x96xf32> to vector<8x8xf32>
    %18 = vector.extract_strided_slice %7 {offsets = [0, 40], sizes = [8, 8], strides = [1, 1]} : vector<8x96xf32> to vector<8x8xf32>
    %19 = vector.extract_strided_slice %7 {offsets = [0, 48], sizes = [8, 8], strides = [1, 1]} : vector<8x96xf32> to vector<8x8xf32>
    %20 = vector.extract_strided_slice %7 {offsets = [0, 56], sizes = [8, 8], strides = [1, 1]} : vector<8x96xf32> to vector<8x8xf32>
    %21 = vector.shape_cast %17 : vector<8x8xf32> to vector<1x8x8xf32>
    %22 = vector.shape_cast %18 : vector<8x8xf32> to vector<1x8x8xf32>
    %23 = vector.shape_cast %19 : vector<8x8xf32> to vector<1x8x8xf32>
    %24 = vector.shape_cast %20 : vector<8x8xf32> to vector<1x8x8xf32>
    %25 = tpu.concatenate %21, %22, %23, %24 in 0 : vector<1x8x8xf32>, vector<1x8x8xf32>, vector<1x8x8xf32>, vector<1x8x8xf32> -> vector<4x8x8xf32>
    %26 = vector.extract_strided_slice %7 {offsets = [0, 64], sizes = [8, 8], strides = [1, 1]} : vector<8x96xf32> to vector<8x8xf32>
    %27 = vector.extract_strided_slice %7 {offsets = [0, 72], sizes = [8, 8], strides = [1, 1]} : vector<8x96xf32> to vector<8x8xf32>
    %28 = vector.extract_strided_slice %7 {offsets = [0, 80], sizes = [8, 8], strides = [1, 1]} : vector<8x96xf32> to vector<8x8xf32>
    %29 = vector.extract_strided_slice %7 {offsets = [0, 88], sizes = [8, 8], strides = [1, 1]} : vector<8x96xf32> to vector<8x8xf32>
    %30 = vector.shape_cast %26 : vector<8x8xf32> to vector<1x8x8xf32>
    %31 = vector.shape_cast %27 : vector<8x8xf32> to vector<1x8x8xf32>
    %32 = vector.shape_cast %28 : vector<8x8xf32> to vector<1x8x8xf32>
    %33 = vector.shape_cast %29 : vector<8x8xf32> to vector<1x8x8xf32>
    %34 = tpu.concatenate %30, %31, %32, %33 in 0 : vector<1x8x8xf32>, vector<1x8x8xf32>, vector<1x8x8xf32>, vector<1x8x8xf32> -> vector<4x8x8xf32>
    %35 = arith.truncf %16 : vector<4x8x8xf32> to vector<4x8x8xbf16>
    %36 = arith.truncf %25 : vector<4x8x8xf32> to vector<4x8x8xbf16>
    %cst_6 = arith.constant dense<0.000000e+00> : vector<4x8x8xf32>
    %37 = tpu.matmul %35, %36, %cst_6 {dimension_numbers = #tpu.dot_dimension_numbers<[2], [2], [1], [1], [0, 0, 0, 1, 1, 1], [0], [0]>} : vector<4x8x8xbf16>, vector<4x8x8xbf16>, vector<4x8x8xf32> -> vector<4x8x8xf32>
    %cst_7 = arith.constant dense<0xFF800000> : vector<4x8xf32>
    %38 = vector.multi_reduction <maximumf>, %37, %cst_7 [2] : vector<4x8x8xf32> to vector<4x8xf32>
    %39 = vector.shape_cast %38 : vector<4x8xf32> to vector<4x8x1xf32>
    %40 = vector.broadcast %39 : vector<4x8x1xf32> to vector<4x8x8xf32>
    %41 = arith.subf %37, %40 : vector<4x8x8xf32>
    %42 = math.exp %41 : vector<4x8x8xf32>
    %cst_8 = arith.constant dense<0.000000e+00> : vector<4x8xf32>
    %43 = vector.multi_reduction <add>, %42, %cst_8 [2] : vector<4x8x8xf32> to vector<4x8xf32>
    %44 = vector.shape_cast %43 : vector<4x8xf32> to vector<4x8x1xf32>
    %45 = tpu.reciprocal %44 {approx = true} : vector<4x8x1xf32> -> vector<4x8x1xf32>
    %46 = vector.broadcast %45 : vector<4x8x1xf32> to vector<4x8x8xf32>
    %47 = arith.mulf %42, %46 : vector<4x8x8xf32>
    %48 = arith.truncf %47 : vector<4x8x8xf32> to vector<4x8x8xbf16>
    %49 = arith.truncf %34 : vector<4x8x8xf32> to vector<4x8x8xbf16>
    %cst_9 = arith.constant dense<0.000000e+00> : vector<4x8x8xf32>
    %50 = tpu.matmul %48, %49, %cst_9 {dimension_numbers = #tpu.dot_dimension_numbers<[2], [1], [1], [2], [0, 0, 0, 1, 1, 2], [0], [0]>} : vector<4x8x8xbf16>, vector<4x8x8xbf16>, vector<4x8x8xf32> -> vector<4x8x8xf32>
    %51 = vector.extract_strided_slice %50 {offsets = [0, 0, 0], sizes = [1, 8, 8], strides = [1, 1, 1]} : vector<4x8x8xf32> to vector<1x8x8xf32>
    %52 = vector.shape_cast %51 : vector<1x8x8xf32> to vector<8x8xf32>
    %53 = vector.extract_strided_slice %50 {offsets = [1, 0, 0], sizes = [1, 8, 8], strides = [1, 1, 1]} : vector<4x8x8xf32> to vector<1x8x8xf32>
    %54 = vector.shape_cast %53 : vector<1x8x8xf32> to vector<8x8xf32>
    %55 = vector.extract_strided_slice %50 {offsets = [2, 0, 0], sizes = [1, 8, 8], strides = [1, 1, 1]} : vector<4x8x8xf32> to vector<1x8x8xf32>
    %56 = vector.shape_cast %55 : vector<1x8x8xf32> to vector<8x8xf32>
    %57 = vector.extract_strided_slice %50 {offsets = [3, 0, 0], sizes = [1, 8, 8], strides = [1, 1, 1]} : vector<4x8x8xf32> to vector<1x8x8xf32>
    %58 = vector.shape_cast %57 : vector<1x8x8xf32> to vector<8x8xf32>
    %59 = tpu.concatenate %52, %54, %56, %58 in 1 : vector<8x8xf32>, vector<8x8xf32>, vector<8x8xf32>, vector<8x8xf32> -> vector<8x32xf32>
    %60 = arith.truncf %59 : vector<8x32xf32> to vector<8x32xbf16>
    %c0_10 = arith.constant 0 : index
    %c0_11 = arith.constant 0 : index
    %61 = vector.load %arg4[%c0_10, %c0_11] : memref<32x32xbf16, #tpu.memory_space<vmem>>, vector<32x32xbf16>
    %cst_12 = arith.constant dense<0.000000e+00> : vector<8x32xf32>
    %62 = tpu.matmul %60, %61, %cst_12 {dimension_numbers = #tpu.dot_dimension_numbers<[1], [0], [0], [1], [0, 0, 1, 1], [], []>} : vector<8x32xbf16>, vector<32x32xbf16>, vector<8x32xf32> -> vector<8x32xf32>
    %c0_13 = arith.constant 0 : index
    %c0_14 = arith.constant 0 : index
    %63 = vector.load %arg5[%c0_13, %c0_14] : memref<1x32xf32, #tpu.memory_space<vmem>>, vector<1x32xf32>
    %64 = vector.broadcast %63 : vector<1x32xf32> to vector<8x32xf32>
    %65 = arith.addf %62, %64 : vector<8x32xf32>
    %66 = arith.truncf %65 : vector<8x32xf32> to vector<8x32xbf16>
    %c0_15 = arith.constant 0 : index
    %c0_16 = arith.constant 0 : index
    %67 = vector.load %arg6[%c0_15, %c0_16] : memref<32x128xbf16, #tpu.memory_space<vmem>>, vector<32x128xbf16>
    %cst_17 = arith.constant dense<0.000000e+00> : vector<8x128xf32>
    %68 = tpu.matmul %66, %67, %cst_17 {dimension_numbers = #tpu.dot_dimension_numbers<[1], [0], [0], [1], [0, 0, 1, 1], [], []>} : vector<8x32xbf16>, vector<32x128xbf16>, vector<8x128xf32> -> vector<8x128xf32>
    %c0_18 = arith.constant 0 : index
    %c0_19 = arith.constant 0 : index
    %69 = vector.load %arg7[%c0_18, %c0_19] : memref<1x128xf32, #tpu.memory_space<vmem>>, vector<1x128xf32>
    %70 = vector.broadcast %69 : vector<1x128xf32> to vector<8x128xf32>
    %71 = arith.addf %68, %70 : vector<8x128xf32>
    %72 = vector.shape_cast %71 : vector<8x128xf32> to vector<1x8x128xf32>
    %c0_20 = arith.constant 0 : index
    %c0_21 = arith.constant 0 : index
    %c0_22 = arith.constant 0 : index
    %73 = vector.load %arg8[%c0_20, %c0_21, %c0_22] : memref<1x8x128xf32, #tpu.memory_space<vmem>>, vector<1x8x128xf32>
    tpu.vector_store %arg8[%c0_20, %c0_21, %c0_22], %72 {strides = array<i32>} : memref<1x8x128xf32, #tpu.memory_space<vmem>>, vector<1x8x128xf32>,
    return
  }
  func.func @transform_0(%arg0: i32) -> (i32, i32, i32) {
    %c0_i32 = arith.constant 0 : i32
    %c0_i32_0 = arith.constant 0 : i32
    %c0_i32_1 = arith.constant 0 : i32
    return %arg0, %c0_i32, %c0_i32_0 : i32, i32, i32
  }
  func.func @transform_1(%arg0: i32) -> (i32, i32) {
    %c0_i32 = arith.constant 0 : i32
    %c0_i32_0 = arith.constant 0 : i32
    %c0_i32_1 = arith.constant 0 : i32
    return %c0_i32, %c0_i32_0 : i32, i32
  }
  func.func @transform_2(%arg0: i32) -> (i32, i32) {
    %c0_i32 = arith.constant 0 : i32
    %c0_i32_0 = arith.constant 0 : i32
    %c0_i32_1 = arith.constant 0 : i32
    return %c0_i32, %c0_i32_0 : i32, i32
  }
  func.func @transform_3(%arg0: i32) -> (i32, i32) {
    %c0_i32 = arith.constant 0 : i32
    %c0_i32_0 = arith.constant 0 : i32
    %c0_i32_1 = arith.constant 0 : i32
    return %c0_i32, %c0_i32_0 : i32, i32
  }
  func.func @transform_4(%arg0: i32) -> (i32, i32) {
    %c0_i32 = arith.constant 0 : i32
    %c0_i32_0 = arith.constant 0 : i32
    %c0_i32_1 = arith.constant 0 : i32
    return %c0_i32, %c0_i32_0 : i32, i32
  }
  func.func @transform_5(%arg0: i32) -> (i32, i32) {
    %c0_i32 = arith.constant 0 : i32
    %c0_i32_0 = arith.constant 0 : i32
    %c0_i32_1 = arith.constant 0 : i32
    return %c0_i32, %c0_i32_0 : i32, i32
  }
  func.func @transform_6(%arg0: i32) -> (i32, i32) {
    %c0_i32 = arith.constant 0 : i32
    %c0_i32_0 = arith.constant 0 : i32
    %c0_i32_1 = arith.constant 0 : i32
    return %c0_i32, %c0_i32_0 : i32, i32
  }
  func.func @transform_7(%arg0: i32) -> (i32, i32, i32) {
    %c0_i32 = arith.constant 0 : i32
    %c0_i32_0 = arith.constant 0 : i32
    %c0_i32_1 = arith.constant 0 : i32
    return %arg0, %c0_i32, %c0_i32_0 : i32, i32, i32
  }
}

</mosaic_0001>

<llo_original>
// kernel: tpu_custom_call.1
$region0: #{tpu_custom_call.1}
  #allocation0 [shape = 'u32[]', space=smem, size = 0x4, offset = 0x4, fixed_abs, tag = 'smem constant byte address 0x4 - core index']
  #allocation1 [shape = 'u32[144,128]{1,0:T(1,128)}', space=vmem, size = 0x12000, scoped, tag = 'internal scratch']
  %s0 = inlined_call_operand.hbm [shape: f32[2,8,32], index: 0, kind: input, shape index: {}]
  %s1 = inlined_call_operand.hbm [shape: bf16[32,96], index: 1, kind: input, shape index: {}]
  %s2 = inlined_call_operand.vmem [shape: f32[1,96], index: 2, kind: input, shape index: {}]
  %s3 = inlined_call_operand.hbm [shape: bf16[32,32], index: 3, kind: input, shape index: {}]
  %s4 = inlined_call_operand.vmem [shape: f32[1,32], index: 4, kind: input, shape index: {}]
  %s5 = inlined_call_operand.vmem [shape: bf16[32,128], index: 5, kind: input, shape index: {}]
  %s6 = inlined_call_operand.vmem [shape: f32[1,128], index: 6, kind: input, shape index: {}]
  %s7 = inlined_call_operand.hbm [shape: f32[2,8,128], index: 7, kind: output, shape index: {}]
  %s8 = sld [smem:[#allocation0]]
  $region73: #{tpu_custom_call.1} parent=0
    _
  %s10 = ssub.s32 1, %s8
  %s11 = scalar_select 0, %s10, %s8
  $region1: #{tpu_custom_call.1} parent=0
    #allocation2 [shape = 'u8[8192]{0}', space=vmem, size = 0x2000, scoped, tag = 'input window, operand 0']
    #allocation3 [shape = 's32[2]{0}', space=sflag, size = 0x8, scoped, tag = 'scoped memory for tpu_custom_call.1']
    #allocation4 [shape = 's32[2]{0}', space=sflag, size = 0x8, scoped, tag = 'scoped memory for tpu_custom_call.1']
    #allocation5 [shape = 'u8[8192]{0}', space=vmem, size = 0x2000, scoped, tag = 'input window, operand 1, single buffered']
    #allocation6 [shape = 's32[1]{0}', space=sflag, size = 0x4, scoped, tag = 'scoped memory for tpu_custom_call.1']
    #allocation7 [shape = 'u8[8192]{0}', space=vmem, size = 0x2000, scoped, tag = 'input window, operand 3, single buffered']
    #allocation8 [shape = 'u8[8192]{0}', space=vmem, size = 0x2000, scoped, tag = 'output window, operand 0']
    %12 = vsyncpa [#allocation3], 0
    %s13 = scalar_lea.sflag [#allocation3], 1
    %14 = vsyncpa %s13, 0
    %15 = vsyncpa [#allocation6], 0
    %16 = vsyncpa [#allocation4], 0
    %s17 = scalar_lea.sflag [#allocation4], 1
    %18 = vsyncpa %s17, 0
    loop: start=0, step=1, limit=4
    $region2: #{tpu_custom_call.1} parent=1 // loop_pre_header
      _
    $region3: #{tpu_custom_call.1} parent=1 // loop_header
      %s20 = sphi 0, %s24
      %p21 = scmp.ge.s32.totalorder %s20, 4
      %s30 = sphi 0, %s32
      %s33 = sphi 0, %s30
      %s34 = sphi 0, %s33
      %s50 = sphi 0, %s34
      %s54 = sphi 0, %s54
      %s56 = sphi 0, %s54
      %s57 = sphi 0, %s56
      %s71 = sphi 0, %s57
      %s75 = sphi 0, %s75
      %s77 = sphi 0, %s75
      %s78 = sphi 0, %s77
      %s92 = sphi 0, %s78
      %s96 = sphi 0, %s96
      %s98 = sphi 0, %s96
      %s99 = sphi 0, %s98
      %s113 = sphi 0, %s99
      %s117 = sphi 0, %s117
      %s119 = sphi 0, %s117
      %s120 = sphi 0, %s119
      %s134 = sphi 0, %s120
      %s138 = sphi 0, %s138
      %s140 = sphi 0, %s138
      %s141 = sphi 0, %s140
      %s155 = sphi 0, %s141
      %s159 = sphi 0, %s159
      %s161 = sphi 0, %s159
      %s162 = sphi 0, %s161
      %s176 = sphi 0, %s162
      %s182 = sphi 0, %s184
      %s185 = sphi 0, %s182
      %s186 = sphi 0, %s185
      %s202 = sphi 0, %s186
    $region4: #{tpu_custom_call.1} parent=1 // loop_header_branch
      %23 = sbr.rel (%p21) target = $region8
    $region5: #{tpu_custom_call.1} parent=1 // loop_body
      %s25 = ssub.s32 %s20, 1
      %s26 = ssub.s32 %s20, 2
      %s27 = sadd.s32 %s20, 1
      %s28 = ssub.s32 %s20, %s27
      %p29 = scmp.eq.s32.totalorder %s28, 0
      %s31 = sadd.s32 %s30, 1
      %s32 = scalar_select %p29, %s30, %s31
      %p35 = pneg %p29
      %p36 = scmp.eq.s32.totalorder %s20, 1
      %p37 = por %p35, %p36
      %p38 = scmp.ne.s32.totalorder %s30, %s33
      %p39 = scmp.eq.s32.totalorder %s20, 0
      %p40 = por %p38, %p39
      %p41 = scmp.ne.s32.totalorder %s30, %s33
      %p42 = scmp.eq.s32.totalorder %s25, 1
      %p43 = por %p41, %p42
      %p44 = scmp.ne.s32.totalorder %s33, %s34
      %p45 = scmp.eq.s32.totalorder %s25, 0
      %p46 = por %p44, %p45
      %p47 = scmp.ne.s32.totalorder %s33, %s34
      %p48 = scmp.eq.s32.totalorder %s26, 1
      %p49 = por %p47, %p48
      %p51 = scmp.ne.s32.totalorder %s34, %s50
      %p52 = scmp.eq.s32.totalorder %s26, 0
      %p53 = por %p51, %p52
      %s55 = sadd.s32 %s54, 1
      %p58 = scmp.eq.s32.totalorder %s20, 1
      %p59 = scmp.ne.s32.totalorder %s54, %s56
      %p60 = scmp.eq.s32.totalorder %s20, 0
      %p61 = por %p59, %p60
      %p62 = scmp.ne.s32.totalorder %s54, %s56
      %p63 = scmp.eq.s32.totalorder %s25, 1
      %p64 = por %p62, %p63
      %p65 = scmp.ne.s32.totalorder %s56, %s57
      %p66 = scmp.eq.s32.totalorder %s25, 0
      %p67 = por %p65, %p66
      %p68 = scmp.ne.s32.totalorder %s56, %s57
      %p69 = scmp.eq.s32.totalorder %s26, 1
      %p70 = por %p68, %p69
      %p72 = scmp.ne.s32.totalorder %s57, %s71
      %p73 = scmp.eq.s32.totalorder %s26, 0
      %p74 = por %p72, %p73
      %s76 = sadd.s32 %s75, 1
      %p79 = scmp.eq.s32.totalorder %s20, 1
      %p80 = scmp.ne.s32.totalorder %s75, %s77
      %p81 = scmp.eq.s32.totalorder %s20, 0
      %p82 = por %p80, %p81
      %p83 = scmp.ne.s32.totalorder %s75, %s77
      %p84 = scmp.eq.s32.totalorder %s25, 1
      %p85 = por %p83, %p84
      %p86 = scmp.ne.s32.totalorder %s77, %s78
      %p87 = scmp.eq.s32.totalorder %s25, 0
      %p88 = por %p86, %p87
      %p89 = scmp.ne.s32.totalorder %s77, %s78
      %p90 = scmp.eq.s32.totalorder %s26, 1
      %p91 = por %p89, %p90
      %p93 = scmp.ne.s32.totalorder %s78, %s92
      %p94 = scmp.eq.s32.totalorder %s26, 0
      %p95 = por %p93, %p94
      %s97 = sadd.s32 %s96, 1
      %p100 = scmp.eq.s32.totalorder %s20, 1
      %p101 = scmp.ne.s32.totalorder %s96, %s98
      %p102 = scmp.eq.s32.totalorder %s20, 0
      %p103 = por %p101, %p102
      %p104 = scmp.ne.s32.totalorder %s96, %s98
      %p105 = scmp.eq.s32.totalorder %s25, 1
      %p106 = por %p104, %p105
      %p107 = scmp.ne.s32.totalorder %s98, %s99
      %p108 = scmp.eq.s32.totalorder %s25, 0
      %p109 = por %p107, %p108
      %p110 = scmp.ne.s32.totalorder %s98, %s99
      %p111 = scmp.eq.s32.totalorder %s26, 1
      %p112 = por %p110, %p111
      %p114 = scmp.ne.s32.totalorder %s99, %s113
      %p115 = scmp.eq.s32.totalorder %s26, 0
      %p116 = por %p114, %p115
      %s118 = sadd.s32 %s117, 1
      %p121 = scmp.eq.s32.totalorder %s20, 1
      %p122 = scmp.ne.s32.totalorder %s117, %s119
      %p123 = scmp.eq.s32.totalorder %s20, 0
      %p124 = por %p122, %p123
      %p125 = scmp.ne.s32.totalorder %s117, %s119
      %p126 = scmp.eq.s32.totalorder %s25, 1
      %p127 = por %p125, %p126
      %p128 = scmp.ne.s32.totalorder %s119, %s120
      %p129 = scmp.eq.s32.totalorder %s25, 0
      %p130 = por %p128, %p129
      %p131 = scmp.ne.s32.totalorder %s119, %s120
      %p132 = scmp.eq.s32.totalorder %s26, 1
      %p133 = por %p131, %p132
      %p135 = scmp.ne.s32.totalorder %s120, %s134
      %p136 = scmp.eq.s32.totalorder %s26, 0
      %p137 = por %p135, %p136
      %s139 = sadd.s32 %s138, 1
      %p142 = scmp.eq.s32.totalorder %s20, 1
      %p143 = scmp.ne.s32.totalorder %s138, %s140
      %p144 = scmp.eq.s32.totalorder %s20, 0
      %p145 = por %p143, %p144
      %p146 = scmp.ne.s32.totalorder %s138, %s140
      %p147 = scmp.eq.s32.totalorder %s25, 1
      %p148 = por %p146, %p147
      %p149 = scmp.ne.s32.totalorder %s140, %s141
      %p150 = scmp.eq.s32.totalorder %s25, 0
      %p151 = por %p149, %p150
      %p152 = scmp.ne.s32.totalorder %s140, %s141
      %p153 = scmp.eq.s32.totalorder %s26, 1
      %p154 = por %p152, %p153
      %p156 = scmp.ne.s32.totalorder %s141, %s155
      %p157 = scmp.eq.s32.totalorder %s26, 0
      %p158 = por %p156, %p157
      %s160 = sadd.s32 %s159, 1
      %p163 = scmp.eq.s32.totalorder %s20, 1
      %p164 = scmp.ne.s32.totalorder %s159, %s161
      %p165 = scmp.eq.s32.totalorder %s20, 0
      %p166 = por %p164, %p165
      %p167 = scmp.ne.s32.totalorder %s159, %s161
      %p168 = scmp.eq.s32.totalorder %s25, 1
      %p169 = por %p167, %p168
      %p170 = scmp.ne.s32.totalorder %s161, %s162
      %p171 = scmp.eq.s32.totalorder %s25, 0
      %p172 = por %p170, %p171
      %p173 = scmp.ne.s32.totalorder %s161, %s162
      %p174 = scmp.eq.s32.totalorder %s26, 1
      %p175 = por %p173, %p174
      %p177 = scmp.ne.s32.totalorder %s162, %s176
      %p178 = scmp.eq.s32.totalorder %s26, 0
      %p179 = por %p177, %p178
      %s180 = ssub.s32 %s20, %s27
      %p181 = scmp.eq.s32.totalorder %s180, 0
      %s183 = sadd.s32 %s182, 1
      %s184 = scalar_select %p181, %s182, %s183
      %p187 = pneg %p181
      %p188 = scmp.eq.s32.totalorder %s20, 1
      %p189 = por %p187, %p188
      %p190 = scmp.ne.s32.totalorder %s182, %s185
      %p191 = scmp.eq.s32.totalorder %s20, 0
      %p192 = por %p190, %p191
      %p193 = scmp.ne.s32.totalorder %s182, %s185
      %p194 = scmp.eq.s32.totalorder %s25, 1
      %p195 = por %p193, %p194
      %p196 = scmp.ne.s32.totalorder %s185, %s186
      %p197 = scmp.eq.s32.totalorder %s25, 0
      %p198 = por %p196, %p197
      %p199 = scmp.ne.s32.totalorder %s185, %s186
      %p200 = scmp.eq.s32.totalorder %s26, 1
      %p201 = por %p199, %p200
      %p203 = scmp.ne.s32.totalorder %s186, %s202
      %p204 = scmp.eq.s32.totalorder %s26, 0
      %p205 = por %p203, %p204
      %p206 = scmp.le.s32.totalorder 1, %s20
      %p207 = scmp.lt.s32.totalorder %s20, 3
      %p208 = pnand %p206, %p207
      %p209 = pneg %p208
      // Predicated region
      $region9: #{tpu_custom_call.1} parent=5 // pred_check
        _
      $region10: #{tpu_custom_call.1} parent=5 // pred_check_branch
        %211 = sbr.rel (%p208) target = $region12
      $region11: #{tpu_custom_call.1} parent=5 // pred_region
        %s212 = ssub.s32 %s20, 1
        // Predicated region
        $region13: #{tpu_custom_call.1} parent=11 // pred_check
          %p213 = pneg %p67
        $region14: #{tpu_custom_call.1} parent=11 // pred_check_branch
          %215 = sbr.rel (%p213) target = $region16
        $region15: #{tpu_custom_call.1} parent=11 // pred_region
          %s217 = ssub.s32 256, 256
          %218 = vsyncadd [#allocation6], %s217
          %s219 = sshll.u32 [#allocation5], 4
          %s220 = int_to_ptr.vmem [resolvable:$true] %s219
          %225 = dma.hbm_to_vmem [thread:$0]  %s1, 256, %s220, [#allocation6], 64, 64, 4
        $region16: #{tpu_custom_call.1} parent=11 // pred_fallthru
          _
        // Predicated region
        $region17: #{tpu_custom_call.1} parent=11 // pred_check
          %p226 = pneg %p88
        $region18: #{tpu_custom_call.1} parent=11 // pred_check_branch
          %228 = sbr.rel (%p226) target = $region20
        $region19: #{tpu_custom_call.1} parent=11 // pred_region
          _
        $region20: #{tpu_custom_call.1} parent=11 // pred_fallthru
          _
        // Predicated region
        $region21: #{tpu_custom_call.1} parent=11 // pred_check
          %p229 = pneg %p109
        $region22: #{tpu_custom_call.1} parent=11 // pred_check_branch
          %231 = sbr.rel (%p229) target = $region24
        $region23: #{tpu_custom_call.1} parent=11 // pred_region
          %s233 = ssub.s32 256, 256
          %234 = vsyncadd [#allocation6], %s233
          %s235 = sshll.u32 [#allocation7], 4
          %s236 = int_to_ptr.vmem [resolvable:$true] %s235
          %241 = dma.hbm_to_vmem [thread:$0]  %s3, 256, %s236, [#allocation6], 64, 64, 4
        $region24: #{tpu_custom_call.1} parent=11 // pred_fallthru
          _
        // Predicated region
        $region25: #{tpu_custom_call.1} parent=11 // pred_check
          %p242 = pneg %p130
        $region26: #{tpu_custom_call.1} parent=11 // pred_check_branch
          %244 = sbr.rel (%p242) target = $region28
        $region27: #{tpu_custom_call.1} parent=11 // pred_region
          _
        $region28: #{tpu_custom_call.1} parent=11 // pred_fallthru
          _
        // Predicated region
        $region29: #{tpu_custom_call.1} parent=11 // pred_check
          %p245 = pneg %p151
        $region30: #{tpu_custom_call.1} parent=11 // pred_check_branch
          %247 = sbr.rel (%p245) target = $region32
        $region31: #{tpu_custom_call.1} parent=11 // pred_region
          _
        $region32: #{tpu_custom_call.1} parent=11 // pred_fallthru
          _
        // Predicated region
        $region33: #{tpu_custom_call.1} parent=11 // pred_check
          %p248 = pneg %p172
        $region34: #{tpu_custom_call.1} parent=11 // pred_check_branch
          %250 = sbr.rel (%p248) target = $region36
        $region35: #{tpu_custom_call.1} parent=11 // pred_region
          _
        $region36: #{tpu_custom_call.1} parent=11 // pred_fallthru
          _
      $region12: #{tpu_custom_call.1} parent=5 // pred_fallthru
        _
      %p251 = scmp.lt.s32.totalorder %s20, 2
      // Predicated region
      $region37: #{tpu_custom_call.1} parent=5 // pred_check
        %p252 = pneg %p251
      $region38: #{tpu_custom_call.1} parent=5 // pred_check_branch
        %254 = sbr.rel (%p252) target = $region40
      $region39: #{tpu_custom_call.1} parent=5 // pred_region
        // Predicated region
        $region41: #{tpu_custom_call.1} parent=39 // pred_check
          %p255 = pneg %p40
        $region42: #{tpu_custom_call.1} parent=39 // pred_check_branch
          %257 = sbr.rel (%p255) target = $region44
        $region43: #{tpu_custom_call.1} parent=39 // pred_region
          %s258 = sand.u32 %s30, 1
          %s259 = scalar_lea.sflag [#allocation3], %s258
          %s260 = sand.u32 %s30, 1
          %s261 = smul.addr %s260, 8
          %s262 = scalar_lea.vmem [#allocation2], %s261
          %s264 = ssub.s32 128, 128
          %265 = vsyncadd %s259, %s264
          %s266 = smul.addr %s20, 128
          %s267 = scalar_lea.hbm %s0, %s266
          %s269 = sshll.u32 %s262, 4
          %s270 = int_to_ptr.vmem [resolvable:$true] %s269
          %272 = dma.hbm_to_vmem [thread:$0]  %s267, 128, %s270, %s259
        $region44: #{tpu_custom_call.1} parent=39 // pred_fallthru
          _
      $region40: #{tpu_custom_call.1} parent=5 // pred_fallthru
        _
      %p273 = scmp.le.s32.totalorder 1, %s20
      %p274 = scmp.lt.s32.totalorder %s20, 3
      %p275 = pnand %p273, %p274
      %p276 = pneg %p275
      // Predicated region
      $region45: #{tpu_custom_call.1} parent=5 // pred_check
        _
      $region46: #{tpu_custom_call.1} parent=5 // pred_check_branch
        %278 = sbr.rel (%p275) target = $region48
      $region47: #{tpu_custom_call.1} parent=5 // pred_region
        %s279 = ssub.s32 %s20, 1
        %s280 = sand.u32 %s33, 1
        %s281 = scalar_lea.sflag [#allocation3], %s280
        %s282 = sand.u32 %s33, 1
        %s283 = smul.addr %s282, 8
        %s284 = scalar_lea.vmem [#allocation2], %s283
        // Predicated region
        $region49: #{tpu_custom_call.1} parent=47 // pred_check
          %p285 = pneg %p46
        $region50: #{tpu_custom_call.1} parent=47 // pred_check_branch
          %287 = sbr.rel (%p285) target = $region52
        $region51: #{tpu_custom_call.1} parent=47 // pred_region
          %288 = dma.done %s281, 128
        $region52: #{tpu_custom_call.1} parent=47 // pred_fallthru
          _
        // Predicated region
        $region53: #{tpu_custom_call.1} parent=47 // pred_check
          %p289 = pneg %p67
        $region54: #{tpu_custom_call.1} parent=47 // pred_check_branch
          %291 = sbr.rel (%p289) target = $region56
        $region55: #{tpu_custom_call.1} parent=47 // pred_region
          %292 = dma.done [#allocation6], 256
        $region56: #{tpu_custom_call.1} parent=47 // pred_fallthru
          _
        // Predicated region
        $region57: #{tpu_custom_call.1} parent=47 // pred_check
          %p293 = pneg %p109
        $region58: #{tpu_custom_call.1} parent=47 // pred_check_branch
          %295 = sbr.rel (%p293) target = $region60
        $region59: #{tpu_custom_call.1} parent=47 // pred_region
          %296 = dma.done [#allocation6], 256
        $region60: #{tpu_custom_call.1} parent=47 // pred_fallthru
          _
        %s297 = sand.u32 %s33, 1
        %s298 = scalar_lea.sflag [#allocation3], %s297
        %s299 = sand.u32 %s33, 1
        %s300 = smul.addr %s299, 8
        %s301 = scalar_lea.vmem [#allocation2], %s300
        %p302 = pneg %p46
        %p303 = pneg %p43
        %p304 = pneg %p67
        %p305 = pneg %p64
        %p306 = pneg %p88
        %p307 = pneg %p85
        %p308 = pneg %p109
        %p309 = pneg %p106
        %p310 = pneg %p130
        %p311 = pneg %p127
        %p312 = pneg %p151
        %p313 = pneg %p148
        %p314 = pneg %p172
        %p315 = pneg %p169
        %p316 = pneg %p198
        %p317 = pneg %p195
        %s318 = sand.u32 %s185, 1
        %s319 = scalar_lea.sflag [#allocation4], %s318
        %s320 = sand.u32 %s185, 1
        %s321 = smul.addr %s320, 8
        %s322 = scalar_lea.vmem [#allocation8], %s321
        %v324 = vld [vmem:[%s284] sm:$0xff]
        %v325 = vpack.c.bf16 %v324, %v324
        %v326 = vld [vmem:[#allocation5] sm:$0xf]
        %v327 = vld [vmem:[#allocation5 + $0x4] sm:$0xf]
        %v328 = vld [vmem:[#allocation5 + $0x8] sm:$0xf]
        %v329 = vld [vmem:[#allocation5 + $0xc] sm:$0xf]
        %v330 = vld [vmem:[%s2] sm:$0x1]
        %v332 = vlaneseq
        %v333 = vshrl.u32 %v332, 7
        %v334 = vsub.s32 0, %v333
        %v335 = vrot.slane %v330, %v334
        %v341 = vunpack.c.l.b16 %v326
        %v342 = vunpack.c.l.b16 %v327
        %v343 = vunpack.c.l.b16 %v328
        %v344 = vunpack.c.l.b16 %v329
        %v345 = vpack.c.b16 %v342, %v341
        %v346 = vpack.c.b16 %v344, %v343
        %vm349 = vcmask 261120
        %v351 = vsel %vm349, %v325, 0
        %353 = vmatprep.subr.bf16.mxu0 0
        %354 = vmatpush1.bf16.msra.mxu0 %v345
        %355 = vmatprep.subr.bf16.mxu0 0
        %356 = vmatpush1.bf16.msra.mxu0 %v346
        %357 = vmatprep.subr.bf16.mxu0 0
        %358 = vmatpush1.bf16.msra.mxu0 0
        %359 = vmatprep.subr.bf16.mxu0 0
        %360 = vmatpush1.bf16.msra.mxu0 0
        %361 = vmatprep.subr.bf16.mxu0 0
        %362 = vmatpush1.bf16.msra.mxu0 0
        %363 = vmatprep.subr.bf16.mxu0 0
        %364 = vmatpush1.bf16.msra.mxu0 0
        %365 = vmatprep.subr.bf16.mxu0 0
        %366 = vmatpush1.bf16.msra.mxu0 0
        %367 = vmatprep.subr.bf16.mxu0 0
        %368 = vmatpush1.bf16.msra.mxu0 0
        %369 = vmatprep.subr.bf16.mxu0 0
        %370 = vmatpush1.bf16.msra.mxu0 0
        %371 = vmatprep.subr.bf16.mxu0 0
        %372 = vmatpush1.bf16.msra.mxu0 0
        %373 = vmatprep.subr.bf16.mxu0 0
        %374 = vmatpush1.bf16.msra.mxu0 0
        %375 = vmatprep.subr.bf16.mxu0 0
        %376 = vmatpush1.bf16.msra.mxu0 0
        %377 = vmatprep.subr.bf16.mxu0 0
        %378 = vmatpush1.bf16.msra.mxu0 0
        %379 = vmatprep.subr.bf16.mxu0 0
        %380 = vmatpush1.bf16.msra.mxu0 0
        %381 = vmatprep.subr.bf16.mxu0 0
        %382 = vmatpush1.bf16.msra.mxu0 0
        %383 = vmatprep.subr.bf16.mxu0 0
        %384 = vmatpush1.bf16.msra.mxu0 0
        %385 = vmatprep.mubr.bf16.mxu0 0
        %386 = vmatmul.mubr.bf16.gmra.mrb[0].mxu0 %v351
        %v387 = vpop.f32.mrb[0].mxu0
        %v388 = vadd.f32 %v335, %v387
        %v389 = vpop.f32.mrb[0].mxu0
        %v390 = vpop.f32.mrb[0].mxu0
        %v391 = vpop.f32.mrb[0].mxu0
        %392 = vdwg.mxu0
        %394 = vrot.lane.b32.xlu0 %v388, 120
        %v395 = vpop.permute.xlu0 %394
        %397 = vrot.lane.b32.xlu0 %v388, 112
        %v398 = vpop.permute.xlu0 %397
        %400 = vrot.lane.b32.xlu0 %v388, 104
        %v401 = vpop.permute.xlu0 %400
        %v403 = vpack.c.bf16 %v388, %v388
        %v404 = vpack.c.bf16 %v395, %v395
        %v405 = vpack.c.bf16 %v398, %v398
        %v406 = vpack.c.bf16 %v401, %v401
        %408 = vrot.lane.b32.xlu0 %v403, 96
        %v409 = vpop.permute.xlu0 %408
        %vm410 = vcmask 64512
        %v412 = vsel %vm410, %v403, 0
        %v415 = vsel %vm410, %v409, 0
        %417 = vmatprep.subr.bf16.mxu0 0
        %418 = vmatpush1.bf16.xpose.msra.mxu0 %v415
        %419 = vmatprep.subr.bf16.mxu0 0
        %420 = vmatpush1.bf16.xpose.msra.mxu0 0
        %421 = vmatprep.subr.bf16.mxu0 0
        %422 = vmatpush1.bf16.xpose.msra.mxu0 0
        %423 = vmatprep.subr.bf16.mxu0 0
        %424 = vmatpush1.bf16.xpose.msra.mxu0 0
        %425 = vmatprep.subr.bf16.mxu0 0
        %426 = vmatpush1.bf16.xpose.msra.mxu0 0
        %427 = vmatprep.subr.bf16.mxu0 0
        %428 = vmatpush1.bf16.xpose.msra.mxu0 0
        %429 = vmatprep.subr.bf16.mxu0 0
        %430 = vmatpush1.bf16.xpose.msra.mxu0 0
        %431 = vmatprep.subr.bf16.mxu0 0
        %432 = vmatpush1.bf16.xpose.msra.mxu0 0
        %433 = vmatprep.subr.bf16.mxu0 0
        %434 = vmatpush1.bf16.xpose.msra.mxu0 0
        %435 = vmatprep.subr.bf16.mxu0 0
        %436 = vmatpush1.bf16.xpose.msra.mxu0 0
        %437 = vmatprep.subr.bf16.mxu0 0
        %438 = vmatpush1.bf16.xpose.msra.mxu0 0
        %439 = vmatprep.subr.bf16.mxu0 0
        %440 = vmatpush1.bf16.xpose.msra.mxu0 0
        %441 = vmatprep.subr.bf16.mxu0 0
        %442 = vmatpush1.bf16.xpose.msra.mxu0 0
        %443 = vmatprep.subr.bf16.mxu0 0
        %444 = vmatpush1.bf16.xpose.msra.mxu0 0
        %445 = vmatprep.subr.bf16.mxu0 0
        %446 = vmatpush1.bf16.xpose.msra.mxu0 0
        %447 = vmatprep.subr.bf16.mxu0 0
        %448 = vmatpush1.bf16.xpose.msra.mxu0 0
        %449 = vmatprep.mubr.bf16.mxu0 0
        %450 = vmatmul.mubr.bf16.gmra.mrb[0].mxu0 %v412
        %v451 = vpop.f32.mrb[0].mxu0
        %v452 = vadd.f32 0.0, %v451
        %v453 = vpop.f32.mrb[0].mxu0
        %v454 = vpop.f32.mrb[0].mxu0
        %v455 = vpop.f32.mrb[0].mxu0
        %456 = vdwg.mxu0
        %458 = vrot.lane.b32.xlu0 %v404, 96
        %v459 = vpop.permute.xlu0 %458
        %v461 = vsel %vm410, %v404, 0
        %v464 = vsel %vm410, %v459, 0
        %466 = vmatprep.subr.bf16.mxu0 0
        %467 = vmatpush1.bf16.xpose.msra.mxu0 %v464
        %468 = vmatprep.subr.bf16.mxu0 0
        %469 = vmatpush1.bf16.xpose.msra.mxu0 0
        %470 = vmatprep.subr.bf16.mxu0 0
        %471 = vmatpush1.bf16.xpose.msra.mxu0 0
        %472 = vmatprep.subr.bf16.mxu0 0
        %473 = vmatpush1.bf16.xpose.msra.mxu0 0
        %474 = vmatprep.subr.bf16.mxu0 0
        %475 = vmatpush1.bf16.xpose.msra.mxu0 0
        %476 = vmatprep.subr.bf16.mxu0 0
        %477 = vmatpush1.bf16.xpose.msra.mxu0 0
        %478 = vmatprep.subr.bf16.mxu0 0
        %479 = vmatpush1.bf16.xpose.msra.mxu0 0
        %480 = vmatprep.subr.bf16.mxu0 0
        %481 = vmatpush1.bf16.xpose.msra.mxu0 0
        %482 = vmatprep.subr.bf16.mxu0 0
        %483 = vmatpush1.bf16.xpose.msra.mxu0 0
        %484 = vmatprep.subr.bf16.mxu0 0
        %485 = vmatpush1.bf16.xpose.msra.mxu0 0
        %486 = vmatprep.subr.bf16.mxu0 0
        %487 = vmatpush1.bf16.xpose.msra.mxu0 0
        %488 = vmatprep.subr.bf16.mxu0 0
        %489 = vmatpush1.bf16.xpose.msra.mxu0 0
        %490 = vmatprep.subr.bf16.mxu0 0
        %491 = vmatpush1.bf16.xpose.msra.mxu0 0
        %492 = vmatprep.subr.bf16.mxu0 0
        %493 = vmatpush1.bf16.xpose.msra.mxu0 0
        %494 = vmatprep.subr.bf16.mxu0 0
        %495 = vmatpush1.bf16.xpose.msra.mxu0 0
        %496 = vmatprep.subr.bf16.mxu0 0
        %497 = vmatpush1.bf16.xpose.msra.mxu0 0
        %498 = vmatprep.mubr.bf16.mxu0 0
        %499 = vmatmul.mubr.bf16.gmra.mrb[0].mxu0 %v461
        %v500 = vpop.f32.mrb[0].mxu0
        %v501 = vadd.f32 0.0, %v500
        %v502 = vpop.f32.mrb[0].mxu0
        %v503 = vpop.f32.mrb[0].mxu0
        %v504 = vpop.f32.mrb[0].mxu0
        %505 = vdwg.mxu0
        %507 = vrot.lane.b32.xlu0 %v405, 96
        %v508 = vpop.permute.xlu0 %507
        %v510 = vsel %vm410, %v405, 0
        %v513 = vsel %vm410, %v508, 0
        %515 = vmatprep.subr.bf16.mxu0 0
        %516 = vmatpush1.bf16.xpose.msra.mxu0 %v513
        %517 = vmatprep.subr.bf16.mxu0 0
        %518 = vmatpush1.bf16.xpose.msra.mxu0 0
        %519 = vmatprep.subr.bf16.mxu0 0
        %520 = vmatpush1.bf16.xpose.msra.mxu0 0
        %521 = vmatprep.subr.bf16.mxu0 0
        %522 = vmatpush1.bf16.xpose.msra.mxu0 0
        %523 = vmatprep.subr.bf16.mxu0 0
        %524 = vmatpush1.bf16.xpose.msra.mxu0 0
        %525 = vmatprep.subr.bf16.mxu0 0
        %526 = vmatpush1.bf16.xpose.msra.mxu0 0
        %527 = vmatprep.subr.bf16.mxu0 0
        %528 = vmatpush1.bf16.xpose.msra.mxu0 0
        %529 = vmatprep.subr.bf16.mxu0 0
        %530 = vmatpush1.bf16.xpose.msra.mxu0 0
        %531 = vmatprep.subr.bf16.mxu0 0
        %532 = vmatpush1.bf16.xpose.msra.mxu0 0
        %533 = vmatprep.subr.bf16.mxu0 0
        %534 = vmatpush1.bf16.xpose.msra.mxu0 0
        %535 = vmatprep.subr.bf16.mxu0 0
        %536 = vmatpush1.bf16.xpose.msra.mxu0 0
        %537 = vmatprep.subr.bf16.mxu0 0
        %538 = vmatpush1.bf16.xpose.msra.mxu0 0
        %539 = vmatprep.subr.bf16.mxu0 0
        %540 = vmatpush1.bf16.xpose.msra.mxu0 0
        %541 = vmatprep.subr.bf16.mxu0 0
        %542 = vmatpush1.bf16.xpose.msra.mxu0 0
        %543 = vmatprep.subr.bf16.mxu0 0
        %544 = vmatpush1.bf16.xpose.msra.mxu0 0
        %545 = vmatprep.subr.bf16.mxu0 0
        %546 = vmatpush1.bf16.xpose.msra.mxu0 0
        %547 = vmatprep.mubr.bf16.mxu0 0
        %548 = vmatmul.mubr.bf16.gmra.mrb[0].mxu0 %v510
        %v549 = vpop.f32.mrb[0].mxu0
        %v550 = vadd.f32 0.0, %v549
        %v551 = vpop.f32.mrb[0].mxu0
        %v552 = vpop.f32.mrb[0].mxu0
        %v553 = vpop.f32.mrb[0].mxu0
        %554 = vdwg.mxu0
        %556 = vrot.lane.b32.xlu0 %v406, 96
        %v557 = vpop.permute.xlu0 %556
        %v559 = vsel %vm410, %v406, 0
        %v562 = vsel %vm410, %v557, 0
        %564 = vmatprep.subr.bf16.mxu0 0
        %565 = vmatpush1.bf16.xpose.msra.mxu0 %v562
        %566 = vmatprep.subr.bf16.mxu0 0
        %567 = vmatpush1.bf16.xpose.msra.mxu0 0
        %568 = vmatprep.subr.bf16.mxu0 0
        %569 = vmatpush1.bf16.xpose.msra.mxu0 0
        %570 = vmatprep.subr.bf16.mxu0 0
        %571 = vmatpush1.bf16.xpose.msra.mxu0 0
        %572 = vmatprep.subr.bf16.mxu0 0
        %573 = vmatpush1.bf16.xpose.msra.mxu0 0
        %574 = vmatprep.subr.bf16.mxu0 0
        %575 = vmatpush1.bf16.xpose.msra.mxu0 0
        %576 = vmatprep.subr.bf16.mxu0 0
        %577 = vmatpush1.bf16.xpose.msra.mxu0 0
        %578 = vmatprep.subr.bf16.mxu0 0
        %579 = vmatpush1.bf16.xpose.msra.mxu0 0
        %580 = vmatprep.subr.bf16.mxu0 0
        %581 = vmatpush1.bf16.xpose.msra.mxu0 0
        %582 = vmatprep.subr.bf16.mxu0 0
        %583 = vmatpush1.bf16.xpose.msra.mxu0 0
        %584 = vmatprep.subr.bf16.mxu0 0
        %585 = vmatpush1.bf16.xpose.msra.mxu0 0
        %586 = vmatprep.subr.bf16.mxu0 0
        %587 = vmatpush1.bf16.xpose.msra.mxu0 0
        %588 = vmatprep.subr.bf16.mxu0 0
        %589 = vmatpush1.bf16.xpose.msra.mxu0 0
        %590 = vmatprep.subr.bf16.mxu0 0
        %591 = vmatpush1.bf16.xpose.msra.mxu0 0
        %592 = vmatprep.subr.bf16.mxu0 0
        %593 = vmatpush1.bf16.xpose.msra.mxu0 0
        %594 = vmatprep.subr.bf16.mxu0 0
        %595 = vmatpush1.bf16.xpose.msra.mxu0 0
        %596 = vmatprep.mubr.bf16.mxu0 0
        %597 = vmatmul.mubr.bf16.gmra.mrb[0].mxu0 %v559
        %v598 = vpop.f32.mrb[0].mxu0
        %v599 = vadd.f32 0.0, %v598
        %v600 = vpop.f32.mrb[0].mxu0
        %v601 = vpop.f32.mrb[0].mxu0
        %v602 = vpop.f32.mrb[0].mxu0
        %603 = vdwg.mxu0
        %v604 = vsel %vm410, %v452, -inf
        %605 = vmax.xlane.f32.xlu0 %v604
        %v606 = vpop.xlane.xlu0 %605
        %v607 = vsel %vm410, %v501, -inf
        %608 = vmax.xlane.f32.xlu0 %v607
        %v609 = vpop.xlane.xlu0 %608
        %v610 = vsel %vm410, %v550, -inf
        %611 = vmax.xlane.f32.xlu0 %v610
        %v612 = vpop.xlane.xlu0 %611
        %v613 = vsel %vm410, %v599, -inf
        %614 = vmax.xlane.f32.xlu0 %v613
        %v615 = vpop.xlane.xlu0 %614
        %v616 = vsub.f32 %v452, %v606
        %v617 = vsub.f32 %v501, %v609
        %v618 = vsub.f32 %v550, %v612
        %v619 = vsub.f32 %v599, %v615
        %v620 = vmul.f32 %v616, 1.442695
        %v621 = vpow.pop %v620
        %v622 = vmul.f32 %v617, 1.442695
        %v623 = vpow.pop %v622
        %v624 = vmul.f32 %v618, 1.442695
        %v625 = vpow.pop %v624
        %v626 = vmul.f32 %v619, 1.442695
        %v627 = vpow.pop %v626
        %v628 = vsel %vm410, %v621, 0.0
        %629 = vadd.xlane.f32.xlu0 %v628
        %v630 = vpop.xlane.xlu0 %629
        %v631 = vsel %vm410, %v623, 0.0
        %632 = vadd.xlane.f32.xlu0 %v631
        %v633 = vpop.xlane.xlu0 %632
        %v634 = vsel %vm410, %v625, 0.0
        %635 = vadd.xlane.f32.xlu0 %v634
        %v636 = vpop.xlane.xlu0 %635
        %v637 = vsel %vm410, %v627, 0.0
        %638 = vadd.xlane.f32.xlu0 %v637
        %v639 = vpop.xlane.xlu0 %638
        %v640 = vrcp.pop %v630
        %v641 = vrcp.pop %v633
        %v642 = vrcp.pop %v636
        %v643 = vrcp.pop %v639
        %v644 = vmul.f32 %v621, %v640
        %v645 = vmul.f32 %v623, %v641
        %v646 = vmul.f32 %v625, %v642
        %v647 = vmul.f32 %v627, %v643
        %v648 = vpack.c.bf16 %v644, %v644
        %v649 = vpack.c.bf16 %v645, %v645
        %v650 = vpack.c.bf16 %v646, %v646
        %v651 = vpack.c.bf16 %v647, %v647
        %652 = vrot.lane.b32.xlu0 %v403, 64
        %v653 = vpop.permute.xlu0 %652
        %v655 = vsel %vm410, %v648, 0
        %vm657 = vcmask 1043456
        %v659 = vsel %vm657, %v653, 0
        %661 = vmatprep.subr.bf16.mxu0 0
        %662 = vmatpush1.bf16.msra.mxu0 %v659
        %663 = vmatprep.subr.bf16.mxu0 0
        %664 = vmatpush1.bf16.msra.mxu0 0
        %665 = vmatprep.subr.bf16.mxu0 0
        %666 = vmatpush1.bf16.msra.mxu0 0
        %667 = vmatprep.subr.bf16.mxu0 0
        %668 = vmatpush1.bf16.msra.mxu0 0
        %669 = vmatprep.subr.bf16.mxu0 0
        %670 = vmatpush1.bf16.msra.mxu0 0
        %671 = vmatprep.subr.bf16.mxu0 0
        %672 = vmatpush1.bf16.msra.mxu0 0
        %673 = vmatprep.subr.bf16.mxu0 0
        %674 = vmatpush1.bf16.msra.mxu0 0
        %675 = vmatprep.subr.bf16.mxu0 0
        %676 = vmatpush1.bf16.msra.mxu0 0
        %677 = vmatprep.subr.bf16.mxu0 0
        %678 = vmatpush1.bf16.msra.mxu0 0
        %679 = vmatprep.subr.bf16.mxu0 0
        %680 = vmatpush1.bf16.msra.mxu0 0
        %681 = vmatprep.subr.bf16.mxu0 0
        %682 = vmatpush1.bf16.msra.mxu0 0
        %683 = vmatprep.subr.bf16.mxu0 0
        %684 = vmatpush1.bf16.msra.mxu0 0
        %685 = vmatprep.subr.bf16.mxu0 0
        %686 = vmatpush1.bf16.msra.mxu0 0
        %687 = vmatprep.subr.bf16.mxu0 0
        %688 = vmatpush1.bf16.msra.mxu0 0
        %689 = vmatprep.subr.bf16.mxu0 0
        %690 = vmatpush1.bf16.msra.mxu0 0
        %691 = vmatprep.subr.bf16.mxu0 0
        %692 = vmatpush1.bf16.msra.mxu0 0
        %693 = vmatprep.mubr.bf16.mxu0 0
        %694 = vmatmul.mubr.bf16.gmra.mrb[0].mxu0 %v655
        %v695 = vpop.f32.mrb[0].mxu0
        %v696 = vadd.f32 0.0, %v695
        %v697 = vpop.f32.mrb[0].mxu0
        %v698 = vpop.f32.mrb[0].mxu0
        %v699 = vpop.f32.mrb[0].mxu0
        %700 = vdwg.mxu0
        %701 = vrot.lane.b32.xlu0 %v404, 64
        %v702 = vpop.permute.xlu0 %701
        %v704 = vsel %vm410, %v649, 0
        %v707 = vsel %vm657, %v702, 0
        %709 = vmatprep.subr.bf16.mxu0 0
        %710 = vmatpush1.bf16.msra.mxu0 %v707
        %711 = vmatprep.subr.bf16.mxu0 0
        %712 = vmatpush1.bf16.msra.mxu0 0
        %713 = vmatprep.subr.bf16.mxu0 0
        %714 = vmatpush1.bf16.msra.mxu0 0
        %715 = vmatprep.subr.bf16.mxu0 0
        %716 = vmatpush1.bf16.msra.mxu0 0
        %717 = vmatprep.subr.bf16.mxu0 0
        %718 = vmatpush1.bf16.msra.mxu0 0
        %719 = vmatprep.subr.bf16.mxu0 0
        %720 = vmatpush1.bf16.msra.mxu0 0
        %721 = vmatprep.subr.bf16.mxu0 0
        %722 = vmatpush1.bf16.msra.mxu0 0
        %723 = vmatprep.subr.bf16.mxu0 0
        %724 = vmatpush1.bf16.msra.mxu0 0
        %725 = vmatprep.subr.bf16.mxu0 0
        %726 = vmatpush1.bf16.msra.mxu0 0
        %727 = vmatprep.subr.bf16.mxu0 0
        %728 = vmatpush1.bf16.msra.mxu0 0
        %729 = vmatprep.subr.bf16.mxu0 0
        %730 = vmatpush1.bf16.msra.mxu0 0
        %731 = vmatprep.subr.bf16.mxu0 0
        %732 = vmatpush1.bf16.msra.mxu0 0
        %733 = vmatprep.subr.bf16.mxu0 0
        %734 = vmatpush1.bf16.msra.mxu0 0
        %735 = vmatprep.subr.bf16.mxu0 0
        %736 = vmatpush1.bf16.msra.mxu0 0
        %737 = vmatprep.subr.bf16.mxu0 0
        %738 = vmatpush1.bf16.msra.mxu0 0
        %739 = vmatprep.subr.bf16.mxu0 0
        %740 = vmatpush1.bf16.msra.mxu0 0
        %741 = vmatprep.mubr.bf16.mxu0 0
        %742 = vmatmul.mubr.bf16.gmra.mrb[0].mxu0 %v704
        %v743 = vpop.f32.mrb[0].mxu0
        %v744 = vadd.f32 0.0, %v743
        %v745 = vpop.f32.mrb[0].mxu0
        %v746 = vpop.f32.mrb[0].mxu0
        %v747 = vpop.f32.mrb[0].mxu0
        %748 = vdwg.mxu0
        %749 = vrot.lane.b32.xlu0 %v405, 64
        %v750 = vpop.permute.xlu0 %749
        %v752 = vsel %vm410, %v650, 0
        %v755 = vsel %vm657, %v750, 0
        %757 = vmatprep.subr.bf16.mxu0 0
        %758 = vmatpush1.bf16.msra.mxu0 %v755
        %759 = vmatprep.subr.bf16.mxu0 0
        %760 = vmatpush1.bf16.msra.mxu0 0
        %761 = vmatprep.subr.bf16.mxu0 0
        %762 = vmatpush1.bf16.msra.mxu0 0
        %763 = vmatprep.subr.bf16.mxu0 0
        %764 = vmatpush1.bf16.msra.mxu0 0
        %765 = vmatprep.subr.bf16.mxu0 0
        %766 = vmatpush1.bf16.msra.mxu0 0
        %767 = vmatprep.subr.bf16.mxu0 0
        %768 = vmatpush1.bf16.msra.mxu0 0
        %769 = vmatprep.subr.bf16.mxu0 0
        %770 = vmatpush1.bf16.msra.mxu0 0
        %771 = vmatprep.subr.bf16.mxu0 0
        %772 = vmatpush1.bf16.msra.mxu0 0
        %773 = vmatprep.subr.bf16.mxu0 0
        %774 = vmatpush1.bf16.msra.mxu0 0
        %775 = vmatprep.subr.bf16.mxu0 0
        %776 = vmatpush1.bf16.msra.mxu0 0
        %777 = vmatprep.subr.bf16.mxu0 0
        %778 = vmatpush1.bf16.msra.mxu0 0
        %779 = vmatprep.subr.bf16.mxu0 0
        %780 = vmatpush1.bf16.msra.mxu0 0
        %781 = vmatprep.subr.bf16.mxu0 0
        %782 = vmatpush1.bf16.msra.mxu0 0
        %783 = vmatprep.subr.bf16.mxu0 0
        %784 = vmatpush1.bf16.msra.mxu0 0
        %785 = vmatprep.subr.bf16.mxu0 0
        %786 = vmatpush1.bf16.msra.mxu0 0
        %787 = vmatprep.subr.bf16.mxu0 0
        %788 = vmatpush1.bf16.msra.mxu0 0
        %789 = vmatprep.mubr.bf16.mxu0 0
        %790 = vmatmul.mubr.bf16.gmra.mrb[0].mxu0 %v752
        %v791 = vpop.f32.mrb[0].mxu0
        %v792 = vadd.f32 0.0, %v791
        %v793 = vpop.f32.mrb[0].mxu0
        %v794 = vpop.f32.mrb[0].mxu0
        %v795 = vpop.f32.mrb[0].mxu0
        %796 = vdwg.mxu0
        %797 = vrot.lane.b32.xlu0 %v406, 64
        %v798 = vpop.permute.xlu0 %797
        %v800 = vsel %vm410, %v651, 0
        %v803 = vsel %vm657, %v798, 0
        %805 = vmatprep.subr.bf16.mxu0 0
        %806 = vmatpush1.bf16.msra.mxu0 %v803
        %807 = vmatprep.subr.bf16.mxu0 0
        %808 = vmatpush1.bf16.msra.mxu0 0
        %809 = vmatprep.subr.bf16.mxu0 0
        %810 = vmatpush1.bf16.msra.mxu0 0
        %811 = vmatprep.subr.bf16.mxu0 0
        %812 = vmatpush1.bf16.msra.mxu0 0
        %813 = vmatprep.subr.bf16.mxu0 0
        %814 = vmatpush1.bf16.msra.mxu0 0
        %815 = vmatprep.subr.bf16.mxu0 0
        %816 = vmatpush1.bf16.msra.mxu0 0
        %817 = vmatprep.subr.bf16.mxu0 0
        %818 = vmatpush1.bf16.msra.mxu0 0
        %819 = vmatprep.subr.bf16.mxu0 0
        %820 = vmatpush1.bf16.msra.mxu0 0
        %821 = vmatprep.subr.bf16.mxu0 0
        %822 = vmatpush1.bf16.msra.mxu0 0
        %823 = vmatprep.subr.bf16.mxu0 0
        %824 = vmatpush1.bf16.msra.mxu0 0
        %825 = vmatprep.subr.bf16.mxu0 0
        %826 = vmatpush1.bf16.msra.mxu0 0
        %827 = vmatprep.subr.bf16.mxu0 0
        %828 = vmatpush1.bf16.msra.mxu0 0
        %829 = vmatprep.subr.bf16.mxu0 0
        %830 = vmatpush1.bf16.msra.mxu0 0
        %831 = vmatprep.subr.bf16.mxu0 0
        %832 = vmatpush1.bf16.msra.mxu0 0
        %833 = vmatprep.subr.bf16.mxu0 0
        %834 = vmatpush1.bf16.msra.mxu0 0
        %835 = vmatprep.subr.bf16.mxu0 0
        %836 = vmatpush1.bf16.msra.mxu0 0
        %837 = vmatprep.mubr.bf16.mxu0 0
        %838 = vmatmul.mubr.bf16.gmra.mrb[0].mxu0 %v800
        %v839 = vpop.f32.mrb[0].mxu0
        %v840 = vadd.f32 0.0, %v839
        %v841 = vpop.f32.mrb[0].mxu0
        %v842 = vpop.f32.mrb[0].mxu0
        %v843 = vpop.f32.mrb[0].mxu0
        %844 = vdwg.mxu0
        %846 = vrot.lane.b32.xlu0 %v744, 8
        %v847 = vpop.permute.xlu0 %846
        %850 = vrot.lane.b32.xlu0 %v792, 16
        %v851 = vpop.permute.xlu0 %850
        %854 = vrot.lane.b32.xlu0 %v840, 24
        %v855 = vpop.permute.xlu0 %854
        %v857 = vsel %vm410, %v696, %v847
        %vm858 = vcmask 130048
        %v859 = vsel %vm858, %v857, %v851
        %vm860 = vcmask 195584
        %v861 = vsel %vm860, %v859, %v855
        %v862 = vpack.c.bf16 %v861, %v861
        %v863 = vld [vmem:[#allocation7] sm:$0xf]
        %v864 = vld [vmem:[#allocation7 + $0x4] sm:$0xf]
        %v865 = vld [vmem:[#allocation7 + $0x8] sm:$0xf]
        %v866 = vld [vmem:[#allocation7 + $0xc] sm:$0xf]
        %v867 = vld [vmem:[%s4] sm:$0x1]
        %v869 = vlaneseq
        %v870 = vshrl.u32 %v869, 7
        %v871 = vsub.s32 0, %v870
        %v872 = vrot.slane %v867, %v871
        %v878 = vunpack.c.l.b16 %v863
        %v879 = vunpack.c.l.b16 %v864
        %v880 = vunpack.c.l.b16 %v865
        %v881 = vunpack.c.l.b16 %v866
        %v882 = vpack.c.b16 %v879, %v878
        %v883 = vpack.c.b16 %v881, %v880
        %v887 = vsel %vm349, %v862, 0
        %889 = vmatprep.subr.bf16.mxu0 0
        %890 = vmatpush1.bf16.msra.mxu0 %v882
        %891 = vmatprep.subr.bf16.mxu0 0
        %892 = vmatpush1.bf16.msra.mxu0 %v883
        %893 = vmatprep.subr.bf16.mxu0 0
        %894 = vmatpush1.bf16.msra.mxu0 0
        %895 = vmatprep.subr.bf16.mxu0 0
        %896 = vmatpush1.bf16.msra.mxu0 0
        %897 = vmatprep.subr.bf16.mxu0 0
        %898 = vmatpush1.bf16.msra.mxu0 0
        %899 = vmatprep.subr.bf16.mxu0 0
        %900 = vmatpush1.bf16.msra.mxu0 0
        %901 = vmatprep.subr.bf16.mxu0 0
        %902 = vmatpush1.bf16.msra.mxu0 0
        %903 = vmatprep.subr.bf16.mxu0 0
        %904 = vmatpush1.bf16.msra.mxu0 0
        %905 = vmatprep.subr.bf16.mxu0 0
        %906 = vmatpush1.bf16.msra.mxu0 0
        %907 = vmatprep.subr.bf16.mxu0 0
        %908 = vmatpush1.bf16.msra.mxu0 0
        %909 = vmatprep.subr.bf16.mxu0 0
        %910 = vmatpush1.bf16.msra.mxu0 0
        %911 = vmatprep.subr.bf16.mxu0 0
        %912 = vmatpush1.bf16.msra.mxu0 0
        %913 = vmatprep.subr.bf16.mxu0 0
        %914 = vmatpush1.bf16.msra.mxu0 0
        %915 = vmatprep.subr.bf16.mxu0 0
        %916 = vmatpush1.bf16.msra.mxu0 0
        %917 = vmatprep.subr.bf16.mxu0 0
        %918 = vmatpush1.bf16.msra.mxu0 0
        %919 = vmatprep.subr.bf16.mxu0 0
        %920 = vmatpush1.bf16.msra.mxu0 0
        %921 = vmatprep.mubr.bf16.mxu0 0
        %922 = vmatmul.mubr.bf16.gmra.mrb[0].mxu0 %v887
        %v923 = vpop.f32.mrb[0].mxu0
        %v924 = vadd.f32 %v872, %v923
        %v925 = vpop.f32.mrb[0].mxu0
        %v926 = vpop.f32.mrb[0].mxu0
        %v927 = vpop.f32.mrb[0].mxu0
        %928 = vdwg.mxu0
        %v929 = vpack.c.bf16 %v924, %v924
        %v930 = vld [vmem:[%s5] sm:$0xf]
        %v931 = vld [vmem:[%s5 + $0x4] sm:$0xf]
        %v932 = vld [vmem:[%s5 + $0x8] sm:$0xf]
        %v933 = vld [vmem:[%s5 + $0xc] sm:$0xf]
        %v934 = vld [vmem:[%s6] sm:$0x1]
        %v936 = vlaneseq
        %v937 = vshrl.u32 %v936, 7
        %v938 = vsub.s32 0, %v937
        %v939 = vrot.slane %v934, %v938
        %v945 = vunpack.c.l.b16 %v930
        %v946 = vunpack.c.l.b16 %v931
        %v947 = vunpack.c.l.b16 %v932
        %v948 = vunpack.c.l.b16 %v933
        %v949 = vpack.c.b16 %v946, %v945
        %v950 = vpack.c.b16 %v948, %v947
        %v954 = vsel %vm349, %v929, 0
        %956 = vmatprep.subr.bf16.mxu0 0
        %957 = vmatpush1.bf16.msra.mxu0 %v949
        %958 = vmatprep.subr.bf16.mxu0 0
        %959 = vmatpush1.bf16.msra.mxu0 %v950
        %960 = vmatprep.subr.bf16.mxu0 0
        %961 = vmatpush1.bf16.msra.mxu0 0
        %962 = vmatprep.subr.bf16.mxu0 0
        %963 = vmatpush1.bf16.msra.mxu0 0
        %964 = vmatprep.subr.bf16.mxu0 0
        %965 = vmatpush1.bf16.msra.mxu0 0
        %966 = vmatprep.subr.bf16.mxu0 0
        %967 = vmatpush1.bf16.msra.mxu0 0
        %968 = vmatprep.subr.bf16.mxu0 0
        %969 = vmatpush1.bf16.msra.mxu0 0
        %970 = vmatprep.subr.bf16.mxu0 0
        %971 = vmatpush1.bf16.msra.mxu0 0
        %972 = vmatprep.subr.bf16.mxu0 0
        %973 = vmatpush1.bf16.msra.mxu0 0
        %974 = vmatprep.subr.bf16.mxu0 0
        %975 = vmatpush1.bf16.msra.mxu0 0
        %976 = vmatprep.subr.bf16.mxu0 0
        %977 = vmatpush1.bf16.msra.mxu0 0
        %978 = vmatprep.subr.bf16.mxu0 0
        %979 = vmatpush1.bf16.msra.mxu0 0
        %980 = vmatprep.subr.bf16.mxu0 0
        %981 = vmatpush1.bf16.msra.mxu0 0
        %982 = vmatprep.subr.bf16.mxu0 0
        %983 = vmatpush1.bf16.msra.mxu0 0
        %984 = vmatprep.subr.bf16.mxu0 0
        %985 = vmatpush1.bf16.msra.mxu0 0
        %986 = vmatprep.subr.bf16.mxu0 0
        %987 = vmatpush1.bf16.msra.mxu0 0
        %988 = vmatprep.mubr.bf16.mxu0 0
        %989 = vmatmul.mubr.bf16.gmra.mrb[0].mxu0 %v954
        %v990 = vpop.f32.mrb[0].mxu0
        %v991 = vadd.f32 %v939, %v990
        %v992 = vpop.f32.mrb[0].mxu0
        %v993 = vpop.f32.mrb[0].mxu0
        %v994 = vpop.f32.mrb[0].mxu0
        %995 = vdwg.mxu0
        %996 = vst [vmem:[%s322] sm:$0xff] %v991
        %s997 = sand.u32 %s185, 1
        %s998 = scalar_lea.sflag [#allocation4], %s997
        %s999 = sand.u32 %s185, 1
        %s1000 = smul.addr %s999, 8
        %s1001 = scalar_lea.vmem [#allocation8], %s1000
        // Predicated region
        $region61: #{tpu_custom_call.1} parent=47 // pred_check
          %p1002 = pneg %p195
        $region62: #{tpu_custom_call.1} parent=47 // pred_check_branch
          %1004 = sbr.rel (%p1002) target = $region64
        $region63: #{tpu_custom_call.1} parent=47 // pred_region
          %s1006 = ssub.s32 128, 128
          %1007 = vsyncadd %s998, %s1006
          %s1008 = smul.addr %s25, 128
          %s1009 = scalar_lea.hbm %s7, %s1008
          %s1011 = sshll.u32 %s1001, 4
          %s1012 = int_to_ptr.vmem [resolvable:$true] %s1011
          %1014 = dma.vmem_to_hbm [thread:$0]  %s1012, 128, %s1009, %s998
        $region64: #{tpu_custom_call.1} parent=47 // pred_fallthru
          _
      $region48: #{tpu_custom_call.1} parent=5 // pred_fallthru
        _
      %p1015 = scmp.le.s32.totalorder 2, %s20
      // Predicated region
      $region65: #{tpu_custom_call.1} parent=5 // pred_check
        %p1016 = pneg %p1015
      $region66: #{tpu_custom_call.1} parent=5 // pred_check_branch
        %1018 = sbr.rel (%p1016) target = $region68
      $region67: #{tpu_custom_call.1} parent=5 // pred_region
        %s1019 = ssub.s32 %s20, 2
        // Predicated region
        $region69: #{tpu_custom_call.1} parent=67 // pred_check
          %p1020 = pneg %p201
        $region70: #{tpu_custom_call.1} parent=67 // pred_check_branch
          %1022 = sbr.rel (%p1020) target = $region72
        $region71: #{tpu_custom_call.1} parent=67 // pred_region
          %s1023 = sand.u32 %s186, 1
          %s1024 = scalar_lea.sflag [#allocation4], %s1023
          %s1025 = sand.u32 %s186, 1
          %s1026 = smul.addr %s1025, 8
          %s1027 = scalar_lea.vmem [#allocation8], %s1026
          %1028 = dma.done %s1024, 128
        $region72: #{tpu_custom_call.1} parent=67 // pred_fallthru
          _
      $region68: #{tpu_custom_call.1} parent=5 // pred_fallthru
        _
    $region6: #{tpu_custom_call.1} parent=1 // loop_footer
      %s24 = sadd.s32 1, %s20
    $region7: #{tpu_custom_call.1} parent=1 // loop_footer_branch
      %19 = sbr.rel target = $region3
    $region8: #{tpu_custom_call.1} parent=1 // loop_exit
      _
    %1029 = vsyncpa [#allocation3], 1
    %s1030 = scalar_lea.sflag [#allocation3], 1
    %1031 = vsyncpa %s1030, 1
    %1032 = vsyncpa [#allocation6], 1
    %1033 = vsyncpa [#allocation4], 1
    %s1034 = scalar_lea.sflag [#allocation4], 1
    %1035 = vsyncpa %s1034, 1

// kernel: tpu_custom_call.1
$region0: #{tpu_custom_call.1}
  #allocation0 [shape = 'u32[]', space=smem, size = 0x4, offset = 0x4, fixed_abs, tag = 'smem constant byte address 0x4 - core index']
  #allocation1 [shape = 'u32[144,128]{1,0:T(1,128)}', space=vmem, size = 0x12000, scoped, tag = 'internal scratch']
  %s0 = inlined_call_operand.hbm [shape: f32[2,8,32], index: 0, kind: input, shape index: {}]
  %s1 = inlined_call_operand.hbm [shape: bf16[32,96], index: 1, kind: input, shape index: {}]
  %s2 = inlined_call_operand.vmem [shape: f32[1,96], index: 2, kind: input, shape index: {}]
  %s3 = inlined_call_operand.hbm [shape: bf16[32,32], index: 3, kind: input, shape index: {}]
  %s4 = inlined_call_operand.vmem [shape: f32[1,32], index: 4, kind: input, shape index: {}]
  %s5 = inlined_call_operand.vmem [shape: bf16[32,128], index: 5, kind: input, shape index: {}]
  %s6 = inlined_call_operand.vmem [shape: f32[1,128], index: 6, kind: input, shape index: {}]
  %s7 = inlined_call_operand.hbm [shape: f32[2,8,128], index: 7, kind: output, shape index: {}]
  %s8 = sld [smem:[#allocation0]]
  $region73: #{tpu_custom_call.1} parent=0
    _
  %s10 = ssub.s32 1, %s8
  %s11 = scalar_select 0, %s10, %s8
  $region1: #{tpu_custom_call.1} parent=0
    #allocation2 [shape = 'u8[8192]{0}', space=vmem, size = 0x2000, scoped, tag = 'input window, operand 0']
    #allocation3 [shape = 's32[2]{0}', space=sflag, size = 0x8, scoped, tag = 'scoped memory for tpu_custom_call.1']
    #allocation4 [shape = 's32[2]{0}', space=sflag, size = 0x8, scoped, tag = 'scoped memory for tpu_custom_call.1']
    #allocation5 [shape = 'u8[8192]{0}', space=vmem, size = 0x2000, scoped, tag = 'input window, operand 1, single buffered']
    #allocation6 [shape = 's32[1]{0}', space=sflag, size = 0x4, scoped, tag = 'scoped memory for tpu_custom_call.1']
    #allocation7 [shape = 'u8[8192]{0}', space=vmem, size = 0x2000, scoped, tag = 'input window, operand 3, single buffered']
    #allocation8 [shape = 'u8[8192]{0}', space=vmem, size = 0x2000, scoped, tag = 'output window, operand 0']
    %12 = vsyncpa [#allocation3], 0
    %s13 = scalar_lea.sflag [#allocation3], 1
    %14 = vsyncpa %s13, 0
    %15 = vsyncpa [#allocation6], 0
    %16 = vsyncpa [#allocation4], 0
    %s17 = scalar_lea.sflag [#allocation4], 1
    %18 = vsyncpa %s17, 0
    loop: start=0, step=1, limit=4
    $region2: #{tpu_custom_call.1} parent=1 // loop_pre_header
      _
    $region3: #{tpu_custom_call.1} parent=1 // loop_header
      %s20 = sphi 0, %s24
      %p21 = scmp.ge.s32.totalorder %s20, 4
      %s30 = sphi 0, %s32
      %s33 = sphi 0, %s30
      %s34 = sphi 0, %s33
      %s50 = sphi 0, %s34
      %s54 = sphi 0, %s54
      %s56 = sphi 0, %s54
      %s57 = sphi 0, %s56
      %s71 = sphi 0, %s57
      %s75 = sphi 0, %s75
      %s77 = sphi 0, %s75
      %s78 = sphi 0, %s77
      %s92 = sphi 0, %s78
      %s96 = sphi 0, %s96
      %s98 = sphi 0, %s96
      %s99 = sphi 0, %s98
      %s113 = sphi 0, %s99
      %s117 = sphi 0, %s117
      %s119 = sphi 0, %s117
      %s120 = sphi 0, %s119
      %s134 = sphi 0, %s120
      %s138 = sphi 0, %s138
      %s140 = sphi 0, %s138
      %s141 = sphi 0, %s140
      %s155 = sphi 0, %s141
      %s159 = sphi 0, %s159
      %s161 = sphi 0, %s159
      %s162 = sphi 0, %s161
      %s176 = sphi 0, %s162
      %s182 = sphi 0, %s184
      %s185 = sphi 0, %s182
      %s186 = sphi 0, %s185
      %s202 = sphi 0, %s186
    $region4: #{tpu_custom_call.1} parent=1 // loop_header_branch
      %23 = sbr.rel (%p21) target = $region8
    $region5: #{tpu_custom_call.1} parent=1 // loop_body
      %s25 = ssub.s32 %s20, 1
      %s26 = ssub.s32 %s20, 2
      %s27 = sadd.s32 %s20, 1
      %s28 = ssub.s32 %s20, %s27
      %p29 = scmp.eq.s32.totalorder %s28, 0
      %s31 = sadd.s32 %s30, 1
      %s32 = scalar_select %p29, %s30, %s31
      %p35 = pneg %p29
      %p36 = scmp.eq.s32.totalorder %s20, 1
      %p37 = por %p35, %p36
      %p38 = scmp.ne.s32.totalorder %s30, %s33
      %p39 = scmp.eq.s32.totalorder %s20, 0
      %p40 = por %p38, %p39
      %p41 = scmp.ne.s32.totalorder %s30, %s33
      %p42 = scmp.eq.s32.totalorder %s25, 1
      %p43 = por %p41, %p42
      %p44 = scmp.ne.s32.totalorder %s33, %s34
      %p45 = scmp.eq.s32.totalorder %s25, 0
      %p46 = por %p44, %p45
      %p47 = scmp.ne.s32.totalorder %s33, %s34
      %p48 = scmp.eq.s32.totalorder %s26, 1
      %p49 = por %p47, %p48
      %p51 = scmp.ne.s32.totalorder %s34, %s50
      %p52 = scmp.eq.s32.totalorder %s26, 0
      %p53 = por %p51, %p52
      %s55 = sadd.s32 %s54, 1
      %p58 = scmp.eq.s32.totalorder %s20, 1
      %p59 = scmp.ne.s32.totalorder %s54, %s56
      %p60 = scmp.eq.s32.totalorder %s20, 0
      %p61 = por %p59, %p60
      %p62 = scmp.ne.s32.totalorder %s54, %s56
      %p63 = scmp.eq.s32.totalorder %s25, 1
      %p64 = por %p62, %p63
      %p65 = scmp.ne.s32.totalorder %s56, %s57
      %p66 = scmp.eq.s32.totalorder %s25, 0
      %p67 = por %p65, %p66
      %p68 = scmp.ne.s32.totalorder %s56, %s57
      %p69 = scmp.eq.s32.totalorder %s26, 1
      %p70 = por %p68, %p69
      %p72 = scmp.ne.s32.totalorder %s57, %s71
      %p73 = scmp.eq.s32.totalorder %s26, 0
      %p74 = por %p72, %p73
      %s76 = sadd.s32 %s75, 1
      %p79 = scmp.eq.s32.totalorder %s20, 1
      %p80 = scmp.ne.s32.totalorder %s75, %s77
      %p81 = scmp.eq.s32.totalorder %s20, 0
      %p82 = por %p80, %p81
      %p83 = scmp.ne.s32.totalorder %s75, %s77
      %p84 = scmp.eq.s32.totalorder %s25, 1
      %p85 = por %p83, %p84
      %p86 = scmp.ne.s32.totalorder %s77, %s78
      %p87 = scmp.eq.s32.totalorder %s25, 0
      %p88 = por %p86, %p87
      %p89 = scmp.ne.s32.totalorder %s77, %s78
      %p90 = scmp.eq.s32.totalorder %s26, 1
      %p91 = por %p89, %p90
      %p93 = scmp.ne.s32.totalorder %s78, %s92
      %p94 = scmp.eq.s32.totalorder %s26, 0
      %p95 = por %p93, %p94
      %s97 = sadd.s32 %s96, 1
      %p100 = scmp.eq.s32.totalorder %s20, 1
      %p101 = scmp.ne.s32.totalorder %s96, %s98
      %p102 = scmp.eq.s32.totalorder %s20, 0
      %p103 = por %p101, %p102
      %p104 = scmp.ne.s32.totalorder %s96, %s98
      %p105 = scmp.eq.s32.totalorder %s25, 1
      %p106 = por %p104, %p105
      %p107 = scmp.ne.s32.totalorder %s98, %s99
      %p108 = scmp.eq.s32.totalorder %s25, 0
      %p109 = por %p107, %p108
      %p110 = scmp.ne.s32.totalorder %s98, %s99
      %p111 = scmp.eq.s32.totalorder %s26, 1
      %p112 = por %p110, %p111
      %p114 = scmp.ne.s32.totalorder %s99, %s113
      %p115 = scmp.eq.s32.totalorder %s26, 0
      %p116 = por %p114, %p115
      %s118 = sadd.s32 %s117, 1
      %p121 = scmp.eq.s32.totalorder %s20, 1
      %p122 = scmp.ne.s32.totalorder %s117, %s119
      %p123 = scmp.eq.s32.totalorder %s20, 0
      %p124 = por %p122, %p123
      %p125 = scmp.ne.s32.totalorder %s117, %s119
      %p126 = scmp.eq.s32.totalorder %s25, 1
      %p127 = por %p125, %p126
      %p128 = scmp.ne.s32.totalorder %s119, %s120
      %p129 = scmp.eq.s32.totalorder %s25, 0
      %p130 = por %p128, %p129
      %p131 = scmp.ne.s32.totalorder %s119, %s120
      %p132 = scmp.eq.s32.totalorder %s26, 1
      %p133 = por %p131, %p132
      %p135 = scmp.ne.s32.totalorder %s120, %s134
      %p136 = scmp.eq.s32.totalorder %s26, 0
      %p137 = por %p135, %p136
      %s139 = sadd.s32 %s138, 1
      %p142 = scmp.eq.s32.totalorder %s20, 1
      %p143 = scmp.ne.s32.totalorder %s138, %s140
      %p144 = scmp.eq.s32.totalorder %s20, 0
      %p145 = por %p143, %p144
      %p146 = scmp.ne.s32.totalorder %s138, %s140
      %p147 = scmp.eq.s32.totalorder %s25, 1
      %p148 = por %p146, %p147
      %p149 = scmp.ne.s32.totalorder %s140, %s141
      %p150 = scmp.eq.s32.totalorder %s25, 0
      %p151 = por %p149, %p150
      %p152 = scmp.ne.s32.totalorder %s140, %s141
      %p153 = scmp.eq.s32.totalorder %s26, 1
      %p154 = por %p152, %p153
      %p156 = scmp.ne.s32.totalorder %s141, %s155
      %p157 = scmp.eq.s32.totalorder %s26, 0
      %p158 = por %p156, %p157
      %s160 = sadd.s32 %s159, 1
      %p163 = scmp.eq.s32.totalorder %s20, 1
      %p164 = scmp.ne.s32.totalorder %s159, %s161
      %p165 = scmp.eq.s32.totalorder %s20, 0
      %p166 = por %p164, %p165
      %p167 = scmp.ne.s32.totalorder %s159, %s161
      %p168 = scmp.eq.s32.totalorder %s25, 1
      %p169 = por %p167, %p168
      %p170 = scmp.ne.s32.totalorder %s161, %s162
      %p171 = scmp.eq.s32.totalorder %s25, 0
      %p172 = por %p170, %p171
      %p173 = scmp.ne.s32.totalorder %s161, %s162
      %p174 = scmp.eq.s32.totalorder %s26, 1
      %p175 = por %p173, %p174
      %p177 = scmp.ne.s32.totalorder %s162, %s176
      %p178 = scmp.eq.s32.totalorder %s26, 0
      %p179 = por %p177, %p178
      %s180 = ssub.s32 %s20, %s27
      %p181 = scmp.eq.s32.totalorder %s180, 0
      %s183 = sadd.s32 %s182, 1
      %s184 = scalar_select %p181, %s182, %s183
      %p187 = pneg %p181
      %p188 = scmp.eq.s32.totalorder %s20, 1
      %p189 = por %p187, %p188
      %p190 = scmp.ne.s32.totalorder %s182, %s185
      %p191 = scmp.eq.s32.totalorder %s20, 0
      %p192 = por %p190, %p191
      %p193 = scmp.ne.s32.totalorder %s182, %s185
      %p194 = scmp.eq.s32.totalorder %s25, 1
      %p195 = por %p193, %p194
      %p196 = scmp.ne.s32.totalorder %s185, %s186
      %p197 = scmp.eq.s32.totalorder %s25, 0
      %p198 = por %p196, %p197
      %p199 = scmp.ne.s32.totalorder %s185, %s186
      %p200 = scmp.eq.s32.totalorder %s26, 1
      %p201 = por %p199, %p200
      %p203 = scmp.ne.s32.totalorder %s186, %s202
      %p204 = scmp.eq.s32.totalorder %s26, 0
      %p205 = por %p203, %p204
      %p206 = scmp.le.s32.totalorder 1, %s20
      %p207 = scmp.lt.s32.totalorder %s20, 3
      %p208 = pnand %p206, %p207
      %p209 = pneg %p208
      // Predicated region
      $region9: #{tpu_custom_call.1} parent=5 // pred_check
        _
      $region10: #{tpu_custom_call.1} parent=5 // pred_check_branch
        %211 = sbr.rel (%p208) target = $region12
      $region11: #{tpu_custom_call.1} parent=5 // pred_region
        %s212 = ssub.s32 %s20, 1
        // Predicated region
        $region13: #{tpu_custom_call.1} parent=11 // pred_check
          %p213 = pneg %p67
        $region14: #{tpu_custom_call.1} parent=11 // pred_check_branch
          %215 = sbr.rel (%p213) target = $region16
        $region15: #{tpu_custom_call.1} parent=11 // pred_region
          %s217 = ssub.s32 256, 256
          %218 = vsyncadd [#allocation6], %s217
          %s219 = sshll.u32 [#allocation5], 4
          %s220 = int_to_ptr.vmem [resolvable:$true] %s219
          %225 = dma.hbm_to_vmem [thread:$0]  %s1, 256, %s220, [#allocation6], 64, 64, 4
        $region16: #{tpu_custom_call.1} parent=11 // pred_fallthru
          _
        // Predicated region
        $region17: #{tpu_custom_call.1} parent=11 // pred_check
          %p226 = pneg %p88
        $region18: #{tpu_custom_call.1} parent=11 // pred_check_branch
          %228 = sbr.rel (%p226) target = $region20
        $region19: #{tpu_custom_call.1} parent=11 // pred_region
          _
        $region20: #{tpu_custom_call.1} parent=11 // pred_fallthru
          _
        // Predicated region
        $region21: #{tpu_custom_call.1} parent=11 // pred_check
          %p229 = pneg %p109
        $region22: #{tpu_custom_call.1} parent=11 // pred_check_branch
          %231 = sbr.rel (%p229) target = $region24
        $region23: #{tpu_custom_call.1} parent=11 // pred_region
          %s233 = ssub.s32 256, 256
          %234 = vsyncadd [#allocation6], %s233
          %s235 = sshll.u32 [#allocation7], 4
          %s236 = int_to_ptr.vmem [resolvable:$true] %s235
          %241 = dma.hbm_to_vmem [thread:$0]  %s3, 256, %s236, [#allocation6], 64, 64, 4
        $region24: #{tpu_custom_call.1} parent=11 // pred_fallthru
          _
        // Predicated region
        $region25: #{tpu_custom_call.1} parent=11 // pred_check
          %p242 = pneg %p130
        $region26: #{tpu_custom_call.1} parent=11 // pred_check_branch
          %244 = sbr.rel (%p242) target = $region28
        $region27: #{tpu_custom_call.1} parent=11 // pred_region
          _
        $region28: #{tpu_custom_call.1} parent=11 // pred_fallthru
          _
        // Predicated region
        $region29: #{tpu_custom_call.1} parent=11 // pred_check
          %p245 = pneg %p151
        $region30: #{tpu_custom_call.1} parent=11 // pred_check_branch
          %247 = sbr.rel (%p245) target = $region32
        $region31: #{tpu_custom_call.1} parent=11 // pred_region
          _
        $region32: #{tpu_custom_call.1} parent=11 // pred_fallthru
          _
        // Predicated region
        $region33: #{tpu_custom_call.1} parent=11 // pred_check
          %p248 = pneg %p172
        $region34: #{tpu_custom_call.1} parent=11 // pred_check_branch
          %250 = sbr.rel (%p248) target = $region36
        $region35: #{tpu_custom_call.1} parent=11 // pred_region
          _
        $region36: #{tpu_custom_call.1} parent=11 // pred_fallthru
          _
      $region12: #{tpu_custom_call.1} parent=5 // pred_fallthru
        _
      %p251 = scmp.lt.s32.totalorder %s20, 2
      // Predicated region
      $region37: #{tpu_custom_call.1} parent=5 // pred_check
        %p252 = pneg %p251
      $region38: #{tpu_custom_call.1} parent=5 // pred_check_branch
        %254 = sbr.rel (%p252) target = $region40
      $region39: #{tpu_custom_call.1} parent=5 // pred_region
        // Predicated region
        $region41: #{tpu_custom_call.1} parent=39 // pred_check
          %p255 = pneg %p40
        $region42: #{tpu_custom_call.1} parent=39 // pred_check_branch
          %257 = sbr.rel (%p255) target = $region44
        $region43: #{tpu_custom_call.1} parent=39 // pred_region
          %s258 = sand.u32 %s30, 1
          %s259 = scalar_lea.sflag [#allocation3], %s258
          %s260 = sand.u32 %s30, 1
          %s261 = smul.addr %s260, 8
          %s262 = scalar_lea.vmem [#allocation2], %s261
          %s264 = ssub.s32 128, 128
          %265 = vsyncadd %s259, %s264
          %s266 = smul.addr %s20, 128
          %s267 = scalar_lea.hbm %s0, %s266
          %s269 = sshll.u32 %s262, 4
          %s270 = int_to_ptr.vmem [resolvable:$true] %s269
          %272 = dma.hbm_to_vmem [thread:$0]  %s267, 128, %s270, %s259
        $region44: #{tpu_custom_call.1} parent=39 // pred_fallthru
          _
      $region40: #{tpu_custom_call.1} parent=5 // pred_fallthru
        _
      %p273 = scmp.le.s32.totalorder 1, %s20
      %p274 = scmp.lt.s32.totalorder %s20, 3
      %p275 = pnand %p273, %p274
      %p276 = pneg %p275
      // Predicated region
      $region45: #{tpu_custom_call.1} parent=5 // pred_check
        _
      $region46: #{tpu_custom_call.1} parent=5 // pred_check_branch
        %278 = sbr.rel (%p275) target = $region48
      $region47: #{tpu_custom_call.1} parent=5 // pred_region
        %s279 = ssub.s32 %s20, 1
        %s280 = sand.u32 %s33, 1
        %s281 = scalar_lea.sflag [#allocation3], %s280
        %s282 = sand.u32 %s33, 1
        %s283 = smul.addr %s282, 8
        %s284 = scalar_lea.vmem [#allocation2], %s283
        // Predicated region
        $region49: #{tpu_custom_call.1} parent=47 // pred_check
          %p285 = pneg %p46
        $region50: #{tpu_custom_call.1} parent=47 // pred_check_branch
          %287 = sbr.rel (%p285) target = $region52
        $region51: #{tpu_custom_call.1} parent=47 // pred_region
          %288 = dma.done %s281, 128
        $region52: #{tpu_custom_call.1} parent=47 // pred_fallthru
          _
        // Predicated region
        $region53: #{tpu_custom_call.1} parent=47 // pred_check
          %p289 = pneg %p67
        $region54: #{tpu_custom_call.1} parent=47 // pred_check_branch
          %291 = sbr.rel (%p289) target = $region56
        $region55: #{tpu_custom_call.1} parent=47 // pred_region
          %292 = dma.done [#allocation6], 256
        $region56: #{tpu_custom_call.1} parent=47 // pred_fallthru
          _
        // Predicated region
        $region57: #{tpu_custom_call.1} parent=47 // pred_check
          %p293 = pneg %p109
        $region58: #{tpu_custom_call.1} parent=47 // pred_check_branch
          %295 = sbr.rel (%p293) target = $region60
        $region59: #{tpu_custom_call.1} parent=47 // pred_region
          %296 = dma.done [#allocation6], 256
        $region60: #{tpu_custom_call.1} parent=47 // pred_fallthru
          _
        %s297 = sand.u32 %s33, 1
        %s298 = scalar_lea.sflag [#allocation3], %s297
        %s299 = sand.u32 %s33, 1
        %s300 = smul.addr %s299, 8
        %s301 = scalar_lea.vmem [#allocation2], %s300
        %p302 = pneg %p46
        %p303 = pneg %p43
        %p304 = pneg %p67
        %p305 = pneg %p64
        %p306 = pneg %p88
        %p307 = pneg %p85
        %p308 = pneg %p109
        %p309 = pneg %p106
        %p310 = pneg %p130
        %p311 = pneg %p127
        %p312 = pneg %p151
        %p313 = pneg %p148
        %p314 = pneg %p172
        %p315 = pneg %p169
        %p316 = pneg %p198
        %p317 = pneg %p195
        %s318 = sand.u32 %s185, 1
        %s319 = scalar_lea.sflag [#allocation4], %s318
        %s320 = sand.u32 %s185, 1
        %s321 = smul.addr %s320, 8
        %s322 = scalar_lea.vmem [#allocation8], %s321
        %v324 = vld [vmem:[%s284] sm:$0xff]
        %v325 = vpack.c.bf16 %v324, %v324
        %v326 = vld [vmem:[#allocation5] sm:$0xf]
        %v327 = vld [vmem:[#allocation5 + $0x4] sm:$0xf]
        %v328 = vld [vmem:[#allocation5 + $0x8] sm:$0xf]
        %v329 = vld [vmem:[#allocation5 + $0xc] sm:$0xf]
        %v330 = vld [vmem:[%s2] sm:$0x1]
        %v332 = vlaneseq
        %v333 = vshrl.u32 %v332, 7
        %v334 = vsub.s32 0, %v333
        %v335 = vrot.slane %v330, %v334
        %v341 = vunpack.c.l.b16 %v326
        %v342 = vunpack.c.l.b16 %v327
        %v343 = vunpack.c.l.b16 %v328
        %v344 = vunpack.c.l.b16 %v329
        %v345 = vpack.c.b16 %v342, %v341
        %v346 = vpack.c.b16 %v344, %v343
        %vm349 = vcmask 261120
        %v351 = vsel %vm349, %v325, 0
        %353 = vmatprep.subr.bf16.mxu0 0
        %354 = vmatpush1.bf16.msra.mxu0 %v345
        %355 = vmatprep.subr.bf16.mxu0 0
        %356 = vmatpush1.bf16.msra.mxu0 %v346
        %357 = vmatprep.subr.bf16.mxu0 0
        %358 = vmatpush1.bf16.msra.mxu0 0
        %359 = vmatprep.subr.bf16.mxu0 0
        %360 = vmatpush1.bf16.msra.mxu0 0
        %361 = vmatprep.subr.bf16.mxu0 0
        %362 = vmatpush1.bf16.msra.mxu0 0
        %363 = vmatprep.subr.bf16.mxu0 0
        %364 = vmatpush1.bf16.msra.mxu0 0
        %365 = vmatprep.subr.bf16.mxu0 0
        %366 = vmatpush1.bf16.msra.mxu0 0
        %367 = vmatprep.subr.bf16.mxu0 0
        %368 = vmatpush1.bf16.msra.mxu0 0
        %369 = vmatprep.subr.bf16.mxu0 0
        %370 = vmatpush1.bf16.msra.mxu0 0
        %371 = vmatprep.subr.bf16.mxu0 0
        %372 = vmatpush1.bf16.msra.mxu0 0
        %373 = vmatprep.subr.bf16.mxu0 0
        %374 = vmatpush1.bf16.msra.mxu0 0
        %375 = vmatprep.subr.bf16.mxu0 0
        %376 = vmatpush1.bf16.msra.mxu0 0
        %377 = vmatprep.subr.bf16.mxu0 0
        %378 = vmatpush1.bf16.msra.mxu0 0
        %379 = vmatprep.subr.bf16.mxu0 0
        %380 = vmatpush1.bf16.msra.mxu0 0
        %381 = vmatprep.subr.bf16.mxu0 0
        %382 = vmatpush1.bf16.msra.mxu0 0
        %383 = vmatprep.subr.bf16.mxu0 0
        %384 = vmatpush1.bf16.msra.mxu0 0
        %385 = vmatprep.mubr.bf16.mxu0 0
        %386 = vmatmul.mubr.bf16.gmra.mrb[0].mxu0 %v351
        %v387 = vpop.f32.mrb[0].mxu0
        %v388 = vadd.f32 %v335, %v387
        %v389 = vpop.f32.mrb[0].mxu0
        %v390 = vpop.f32.mrb[0].mxu0
        %v391 = vpop.f32.mrb[0].mxu0
        %392 = vdwg.mxu0
        %394 = vrot.lane.b32.xlu0 %v388, 120
        %v395 = vpop.permute.xlu0 %394
        %397 = vrot.lane.b32.xlu0 %v388, 112
        %v398 = vpop.permute.xlu0 %397
        %400 = vrot.lane.b32.xlu0 %v388, 104
        %v401 = vpop.permute.xlu0 %400
        %v403 = vpack.c.bf16 %v388, %v388
        %v404 = vpack.c.bf16 %v395, %v395
        %v405 = vpack.c.bf16 %v398, %v398
        %v406 = vpack.c.bf16 %v401, %v401
        %408 = vrot.lane.b32.xlu0 %v403, 96
        %v409 = vpop.permute.xlu0 %408
        %vm410 = vcmask 64512
        %v412 = vsel %vm410, %v403, 0
        %v415 = vsel %vm410, %v409, 0
        %417 = vmatprep.subr.bf16.mxu0 0
        %418 = vmatpush1.bf16.xpose.msra.mxu0 %v415
        %419 = vmatprep.subr.bf16.mxu0 0
        %420 = vmatpush1.bf16.xpose.msra.mxu0 0
        %421 = vmatprep.subr.bf16.mxu0 0
        %422 = vmatpush1.bf16.xpose.msra.mxu0 0
        %423 = vmatprep.subr.bf16.mxu0 0
        %424 = vmatpush1.bf16.xpose.msra.mxu0 0
        %425 = vmatprep.subr.bf16.mxu0 0
        %426 = vmatpush1.bf16.xpose.msra.mxu0 0
        %427 = vmatprep.subr.bf16.mxu0 0
        %428 = vmatpush1.bf16.xpose.msra.mxu0 0
        %429 = vmatprep.subr.bf16.mxu0 0
        %430 = vmatpush1.bf16.xpose.msra.mxu0 0
        %431 = vmatprep.subr.bf16.mxu0 0
        %432 = vmatpush1.bf16.xpose.msra.mxu0 0
        %433 = vmatprep.subr.bf16.mxu0 0
        %434 = vmatpush1.bf16.xpose.msra.mxu0 0
        %435 = vmatprep.subr.bf16.mxu0 0
        %436 = vmatpush1.bf16.xpose.msra.mxu0 0
        %437 = vmatprep.subr.bf16.mxu0 0
        %438 = vmatpush1.bf16.xpose.msra.mxu0 0
        %439 = vmatprep.subr.bf16.mxu0 0
        %440 = vmatpush1.bf16.xpose.msra.mxu0 0
        %441 = vmatprep.subr.bf16.mxu0 0
        %442 = vmatpush1.bf16.xpose.msra.mxu0 0
        %443 = vmatprep.subr.bf16.mxu0 0
        %444 = vmatpush1.bf16.xpose.msra.mxu0 0
        %445 = vmatprep.subr.bf16.mxu0 0
        %446 = vmatpush1.bf16.xpose.msra.mxu0 0
        %447 = vmatprep.subr.bf16.mxu0 0
        %448 = vmatpush1.bf16.xpose.msra.mxu0 0
        %449 = vmatprep.mubr.bf16.mxu0 0
        %450 = vmatmul.mubr.bf16.gmra.mrb[0].mxu0 %v412
        %v451 = vpop.f32.mrb[0].mxu0
        %v452 = vadd.f32 0.0, %v451
        %v453 = vpop.f32.mrb[0].mxu0
        %v454 = vpop.f32.mrb[0].mxu0
        %v455 = vpop.f32.mrb[0].mxu0
        %456 = vdwg.mxu0
        %458 = vrot.lane.b32.xlu0 %v404, 96
        %v459 = vpop.permute.xlu0 %458
        %v461 = vsel %vm410, %v404, 0
        %v464 = vsel %vm410, %v459, 0
        %466 = vmatprep.subr.bf16.mxu0 0
        %467 = vmatpush1.bf16.xpose.msra.mxu0 %v464
        %468 = vmatprep.subr.bf16.mxu0 0
        %469 = vmatpush1.bf16.xpose.msra.mxu0 0
        %470 = vmatprep.subr.bf16.mxu0 0
        %471 = vmatpush1.bf16.xpose.msra.mxu0 0
        %472 = vmatprep.subr.bf16.mxu0 0
        %473 = vmatpush1.bf16.xpose.msra.mxu0 0
        %474 = vmatprep.subr.bf16.mxu0 0
        %475 = vmatpush1.bf16.xpose.msra.mxu0 0
        %476 = vmatprep.subr.bf16.mxu0 0
        %477 = vmatpush1.bf16.xpose.msra.mxu0 0
        %478 = vmatprep.subr.bf16.mxu0 0
        %479 = vmatpush1.bf16.xpose.msra.mxu0 0
        %480 = vmatprep.subr.bf16.mxu0 0
        %481 = vmatpush1.bf16.xpose.msra.mxu0 0
        %482 = vmatprep.subr.bf16.mxu0 0
        %483 = vmatpush1.bf16.xpose.msra.mxu0 0
        %484 = vmatprep.subr.bf16.mxu0 0
        %485 = vmatpush1.bf16.xpose.msra.mxu0 0
        %486 = vmatprep.subr.bf16.mxu0 0
        %487 = vmatpush1.bf16.xpose.msra.mxu0 0
        %488 = vmatprep.subr.bf16.mxu0 0
        %489 = vmatpush1.bf16.xpose.msra.mxu0 0
        %490 = vmatprep.subr.bf16.mxu0 0
        %491 = vmatpush1.bf16.xpose.msra.mxu0 0
        %492 = vmatprep.subr.bf16.mxu0 0
        %493 = vmatpush1.bf16.xpose.msra.mxu0 0
        %494 = vmatprep.subr.bf16.mxu0 0
        %495 = vmatpush1.bf16.xpose.msra.mxu0 0
        %496 = vmatprep.subr.bf16.mxu0 0
        %497 = vmatpush1.bf16.xpose.msra.mxu0 0
        %498 = vmatprep.mubr.bf16.mxu0 0
        %499 = vmatmul.mubr.bf16.gmra.mrb[0].mxu0 %v461
        %v500 = vpop.f32.mrb[0].mxu0
        %v501 = vadd.f32 0.0, %v500
        %v502 = vpop.f32.mrb[0].mxu0
        %v503 = vpop.f32.mrb[0].mxu0
        %v504 = vpop.f32.mrb[0].mxu0
        %505 = vdwg.mxu0
        %507 = vrot.lane.b32.xlu0 %v405, 96
        %v508 = vpop.permute.xlu0 %507
        %v510 = vsel %vm410, %v405, 0
        %v513 = vsel %vm410, %v508, 0
        %515 = vmatprep.subr.bf16.mxu0 0
        %516 = vmatpush1.bf16.xpose.msra.mxu0 %v513
        %517 = vmatprep.subr.bf16.mxu0 0
        %518 = vmatpush1.bf16.xpose.msra.mxu0 0
        %519 = vmatprep.subr.bf16.mxu0 0
        %520 = vmatpush1.bf16.xpose.msra.mxu0 0
        %521 = vmatprep.subr.bf16.mxu0 0
        %522 = vmatpush1.bf16.xpose.msra.mxu0 0
        %523 = vmatprep.subr.bf16.mxu0 0
        %524 = vmatpush1.bf16.xpose.msra.mxu0 0
        %525 = vmatprep.subr.bf16.mxu0 0
        %526 = vmatpush1.bf16.xpose.msra.mxu0 0
        %527 = vmatprep.subr.bf16.mxu0 0
        %528 = vmatpush1.bf16.xpose.msra.mxu0 0
        %529 = vmatprep.subr.bf16.mxu0 0
        %530 = vmatpush1.bf16.xpose.msra.mxu0 0
        %531 = vmatprep.subr.bf16.mxu0 0
        %532 = vmatpush1.bf16.xpose.msra.mxu0 0
        %533 = vmatprep.subr.bf16.mxu0 0
        %534 = vmatpush1.bf16.xpose.msra.mxu0 0
        %535 = vmatprep.subr.bf16.mxu0 0
        %536 = vmatpush1.bf16.xpose.msra.mxu0 0
        %537 = vmatprep.subr.bf16.mxu0 0
        %538 = vmatpush1.bf16.xpose.msra.mxu0 0
        %539 = vmatprep.subr.bf16.mxu0 0
        %540 = vmatpush1.bf16.xpose.msra.mxu0 0
        %541 = vmatprep.subr.bf16.mxu0 0
        %542 = vmatpush1.bf16.xpose.msra.mxu0 0
        %543 = vmatprep.subr.bf16.mxu0 0
        %544 = vmatpush1.bf16.xpose.msra.mxu0 0
        %545 = vmatprep.subr.bf16.mxu0 0
        %546 = vmatpush1.bf16.xpose.msra.mxu0 0
        %547 = vmatprep.mubr.bf16.mxu0 0
        %548 = vmatmul.mubr.bf16.gmra.mrb[0].mxu0 %v510
        %v549 = vpop.f32.mrb[0].mxu0
        %v550 = vadd.f32 0.0, %v549
        %v551 = vpop.f32.mrb[0].mxu0
        %v552 = vpop.f32.mrb[0].mxu0
        %v553 = vpop.f32.mrb[0].mxu0
        %554 = vdwg.mxu0
        %556 = vrot.lane.b32.xlu0 %v406, 96
        %v557 = vpop.permute.xlu0 %556
        %v559 = vsel %vm410, %v406, 0
        %v562 = vsel %vm410, %v557, 0
        %564 = vmatprep.subr.bf16.mxu0 0
        %565 = vmatpush1.bf16.xpose.msra.mxu0 %v562
        %566 = vmatprep.subr.bf16.mxu0 0
        %567 = vmatpush1.bf16.xpose.msra.mxu0 0
        %568 = vmatprep.subr.bf16.mxu0 0
        %569 = vmatpush1.bf16.xpose.msra.mxu0 0
        %570 = vmatprep.subr.bf16.mxu0 0
        %571 = vmatpush1.bf16.xpose.msra.mxu0 0
        %572 = vmatprep.subr.bf16.mxu0 0
        %573 = vmatpush1.bf16.xpose.msra.mxu0 0
        %574 = vmatprep.subr.bf16.mxu0 0
        %575 = vmatpush1.bf16.xpose.msra.mxu0 0
        %576 = vmatprep.subr.bf16.mxu0 0
        %577 = vmatpush1.bf16.xpose.msra.mxu0 0
        %578 = vmatprep.subr.bf16.mxu0 0
        %579 = vmatpush1.bf16.xpose.msra.mxu0 0
        %580 = vmatprep.subr.bf16.mxu0 0
        %581 = vmatpush1.bf16.xpose.msra.mxu0 0
        %582 = vmatprep.subr.bf16.mxu0 0
        %583 = vmatpush1.bf16.xpose.msra.mxu0 0
        %584 = vmatprep.subr.bf16.mxu0 0
        %585 = vmatpush1.bf16.xpose.msra.mxu0 0
        %586 = vmatprep.subr.bf16.mxu0 0
        %587 = vmatpush1.bf16.xpose.msra.mxu0 0
        %588 = vmatprep.subr.bf16.mxu0 0
        %589 = vmatpush1.bf16.xpose.msra.mxu0 0
        %590 = vmatprep.subr.bf16.mxu0 0
        %591 = vmatpush1.bf16.xpose.msra.mxu0 0
        %592 = vmatprep.subr.bf16.mxu0 0
        %593 = vmatpush1.bf16.xpose.msra.mxu0 0
        %594 = vmatprep.subr.bf16.mxu0 0
        %595 = vmatpush1.bf16.xpose.msra.mxu0 0
        %596 = vmatprep.mubr.bf16.mxu0 0
        %597 = vmatmul.mubr.bf16.gmra.mrb[0].mxu0 %v559
        %v598 = vpop.f32.mrb[0].mxu0
        %v599 = vadd.f32 0.0, %v598
        %v600 = vpop.f32.mrb[0].mxu0
        %v601 = vpop.f32.mrb[0].mxu0
        %v602 = vpop.f32.mrb[0].mxu0
        %603 = vdwg.mxu0
        %v604 = vsel %vm410, %v452, -inf
        %605 = vmax.xlane.f32.xlu0 %v604
        %v606 = vpop.xlane.xlu0 %605
        %v607 = vsel %vm410, %v501, -inf
        %608 = vmax.xlane.f32.xlu0 %v607
        %v609 = vpop.xlane.xlu0 %608
        %v610 = vsel %vm410, %v550, -inf
        %611 = vmax.xlane.f32.xlu0 %v610
        %v612 = vpop.xlane.xlu0 %611
        %v613 = vsel %vm410, %v599, -inf
        %614 = vmax.xlane.f32.xlu0 %v613
        %v615 = vpop.xlane.xlu0 %614
        %v616 = vsub.f32 %v452, %v606
        %v617 = vsub.f32 %v501, %v609
        %v618 = vsub.f32 %v550, %v612
        %v619 = vsub.f32 %v599, %v615
        %v620 = vmul.f32 %v616, 1.442695
        %v621 = vpow.pop %v620
        %v622 = vmul.f32 %v617, 1.442695
        %v623 = vpow.pop %v622
        %v624 = vmul.f32 %v618, 1.442695
        %v625 = vpow.pop %v624
        %v626 = vmul.f32 %v619, 1.442695
        %v627 = vpow.pop %v626
        %v628 = vsel %vm410, %v621, 0.0
        %629 = vadd.xlane.f32.xlu0 %v628
        %v630 = vpop.xlane.xlu0 %629
        %v631 = vsel %vm410, %v623, 0.0
        %632 = vadd.xlane.f32.xlu0 %v631
        %v633 = vpop.xlane.xlu0 %632
        %v634 = vsel %vm410, %v625, 0.0
        %635 = vadd.xlane.f32.xlu0 %v634
        %v636 = vpop.xlane.xlu0 %635
        %v637 = vsel %vm410, %v627, 0.0
        %638 = vadd.xlane.f32.xlu0 %v637
        %v639 = vpop.xlane.xlu0 %638
        %v640 = vrcp.pop %v630
        %v641 = vrcp.pop %v633
        %v642 = vrcp.pop %v636
        %v643 = vrcp.pop %v639
        %v644 = vmul.f32 %v621, %v640
        %v645 = vmul.f32 %v623, %v641
        %v646 = vmul.f32 %v625, %v642
        %v647 = vmul.f32 %v627, %v643
        %v648 = vpack.c.bf16 %v644, %v644
        %v649 = vpack.c.bf16 %v645, %v645
        %v650 = vpack.c.bf16 %v646, %v646
        %v651 = vpack.c.bf16 %v647, %v647
        %652 = vrot.lane.b32.xlu0 %v403, 64
        %v653 = vpop.permute.xlu0 %652
        %v655 = vsel %vm410, %v648, 0
        %vm657 = vcmask 1043456
        %v659 = vsel %vm657, %v653, 0
        %661 = vmatprep.subr.bf16.mxu0 0
        %662 = vmatpush1.bf16.msra.mxu0 %v659
        %663 = vmatprep.subr.bf16.mxu0 0
        %664 = vmatpush1.bf16.msra.mxu0 0
        %665 = vmatprep.subr.bf16.mxu0 0
        %666 = vmatpush1.bf16.msra.mxu0 0
        %667 = vmatprep.subr.bf16.mxu0 0
        %668 = vmatpush1.bf16.msra.mxu0 0
        %669 = vmatprep.subr.bf16.mxu0 0
        %670 = vmatpush1.bf16.msra.mxu0 0
        %671 = vmatprep.subr.bf16.mxu0 0
        %672 = vmatpush1.bf16.msra.mxu0 0
        %673 = vmatprep.subr.bf16.mxu0 0
        %674 = vmatpush1.bf16.msra.mxu0 0
        %675 = vmatprep.subr.bf16.mxu0 0
        %676 = vmatpush1.bf16.msra.mxu0 0
        %677 = vmatprep.subr.bf16.mxu0 0
        %678 = vmatpush1.bf16.msra.mxu0 0
        %679 = vmatprep.subr.bf16.mxu0 0
        %680 = vmatpush1.bf16.msra.mxu0 0
        %681 = vmatprep.subr.bf16.mxu0 0
        %682 = vmatpush1.bf16.msra.mxu0 0
        %683 = vmatprep.subr.bf16.mxu0 0
        %684 = vmatpush1.bf16.msra.mxu0 0
        %685 = vmatprep.subr.bf16.mxu0 0
        %686 = vmatpush1.bf16.msra.mxu0 0
        %687 = vmatprep.subr.bf16.mxu0 0
        %688 = vmatpush1.bf16.msra.mxu0 0
        %689 = vmatprep.subr.bf16.mxu0 0
        %690 = vmatpush1.bf16.msra.mxu0 0
        %691 = vmatprep.subr.bf16.mxu0 0
        %692 = vmatpush1.bf16.msra.mxu0 0
        %693 = vmatprep.mubr.bf16.mxu0 0
        %694 = vmatmul.mubr.bf16.gmra.mrb[0].mxu0 %v655
        %v695 = vpop.f32.mrb[0].mxu0
        %v696 = vadd.f32 0.0, %v695
        %v697 = vpop.f32.mrb[0].mxu0
        %v698 = vpop.f32.mrb[0].mxu0
        %v699 = vpop.f32.mrb[0].mxu0
        %700 = vdwg.mxu0
        %701 = vrot.lane.b32.xlu0 %v404, 64
        %v702 = vpop.permute.xlu0 %701
        %v704 = vsel %vm410, %v649, 0
        %v707 = vsel %vm657, %v702, 0
        %709 = vmatprep.subr.bf16.mxu0 0
        %710 = vmatpush1.bf16.msra.mxu0 %v707
        %711 = vmatprep.subr.bf16.mxu0 0
        %712 = vmatpush1.bf16.msra.mxu0 0
        %713 = vmatprep.subr.bf16.mxu0 0
        %714 = vmatpush1.bf16.msra.mxu0 0
        %715 = vmatprep.subr.bf16.mxu0 0
        %716 = vmatpush1.bf16.msra.mxu0 0
        %717 = vmatprep.subr.bf16.mxu0 0
        %718 = vmatpush1.bf16.msra.mxu0 0
        %719 = vmatprep.subr.bf16.mxu0 0
        %720 = vmatpush1.bf16.msra.mxu0 0
        %721 = vmatprep.subr.bf16.mxu0 0
        %722 = vmatpush1.bf16.msra.mxu0 0
        %723 = vmatprep.subr.bf16.mxu0 0
        %724 = vmatpush1.bf16.msra.mxu0 0
        %725 = vmatprep.subr.bf16.mxu0 0
        %726 = vmatpush1.bf16.msra.mxu0 0
        %727 = vmatprep.subr.bf16.mxu0 0
        %728 = vmatpush1.bf16.msra.mxu0 0
        %729 = vmatprep.subr.bf16.mxu0 0
        %730 = vmatpush1.bf16.msra.mxu0 0
        %731 = vmatprep.subr.bf16.mxu0 0
        %732 = vmatpush1.bf16.msra.mxu0 0
        %733 = vmatprep.subr.bf16.mxu0 0
        %734 = vmatpush1.bf16.msra.mxu0 0
        %735 = vmatprep.subr.bf16.mxu0 0
        %736 = vmatpush1.bf16.msra.mxu0 0
        %737 = vmatprep.subr.bf16.mxu0 0
        %738 = vmatpush1.bf16.msra.mxu0 0
        %739 = vmatprep.subr.bf16.mxu0 0
        %740 = vmatpush1.bf16.msra.mxu0 0
        %741 = vmatprep.mubr.bf16.mxu0 0
        %742 = vmatmul.mubr.bf16.gmra.mrb[0].mxu0 %v704
        %v743 = vpop.f32.mrb[0].mxu0
        %v744 = vadd.f32 0.0, %v743
        %v745 = vpop.f32.mrb[0].mxu0
        %v746 = vpop.f32.mrb[0].mxu0
        %v747 = vpop.f32.mrb[0].mxu0
        %748 = vdwg.mxu0
        %749 = vrot.lane.b32.xlu0 %v405, 64
        %v750 = vpop.permute.xlu0 %749
        %v752 = vsel %vm410, %v650, 0
        %v755 = vsel %vm657, %v750, 0
        %757 = vmatprep.subr.bf16.mxu0 0
        %758 = vmatpush1.bf16.msra.mxu0 %v755
        %759 = vmatprep.subr.bf16.mxu0 0
        %760 = vmatpush1.bf16.msra.mxu0 0
        %761 = vmatprep.subr.bf16.mxu0 0
        %762 = vmatpush1.bf16.msra.mxu0 0
        %763 = vmatprep.subr.bf16.mxu0 0
        %764 = vmatpush1.bf16.msra.mxu0 0
        %765 = vmatprep.subr.bf16.mxu0 0
        %766 = vmatpush1.bf16.msra.mxu0 0
        %767 = vmatprep.subr.bf16.mxu0 0
        %768 = vmatpush1.bf16.msra.mxu0 0
        %769 = vmatprep.subr.bf16.mxu0 0
        %770 = vmatpush1.bf16.msra.mxu0 0
        %771 = vmatprep.subr.bf16.mxu0 0
        %772 = vmatpush1.bf16.msra.mxu0 0
        %773 = vmatprep.subr.bf16.mxu0 0
        %774 = vmatpush1.bf16.msra.mxu0 0
        %775 = vmatprep.subr.bf16.mxu0 0
        %776 = vmatpush1.bf16.msra.mxu0 0
        %777 = vmatprep.subr.bf16.mxu0 0
        %778 = vmatpush1.bf16.msra.mxu0 0
        %779 = vmatprep.subr.bf16.mxu0 0
        %780 = vmatpush1.bf16.msra.mxu0 0
        %781 = vmatprep.subr.bf16.mxu0 0
        %782 = vmatpush1.bf16.msra.mxu0 0
        %783 = vmatprep.subr.bf16.mxu0 0
        %784 = vmatpush1.bf16.msra.mxu0 0
        %785 = vmatprep.subr.bf16.mxu0 0
        %786 = vmatpush1.bf16.msra.mxu0 0
        %787 = vmatprep.subr.bf16.mxu0 0
        %788 = vmatpush1.bf16.msra.mxu0 0
        %789 = vmatprep.mubr.bf16.mxu0 0
        %790 = vmatmul.mubr.bf16.gmra.mrb[0].mxu0 %v752
        %v791 = vpop.f32.mrb[0].mxu0
        %v792 = vadd.f32 0.0, %v791
        %v793 = vpop.f32.mrb[0].mxu0
        %v794 = vpop.f32.mrb[0].mxu0
        %v795 = vpop.f32.mrb[0].mxu0
        %796 = vdwg.mxu0
        %797 = vrot.lane.b32.xlu0 %v406, 64
        %v798 = vpop.permute.xlu0 %797
        %v800 = vsel %vm410, %v651, 0
        %v803 = vsel %vm657, %v798, 0
        %805 = vmatprep.subr.bf16.mxu0 0
        %806 = vmatpush1.bf16.msra.mxu0 %v803
        %807 = vmatprep.subr.bf16.mxu0 0
        %808 = vmatpush1.bf16.msra.mxu0 0
        %809 = vmatprep.subr.bf16.mxu0 0
        %810 = vmatpush1.bf16.msra.mxu0 0
        %811 = vmatprep.subr.bf16.mxu0 0
        %812 = vmatpush1.bf16.msra.mxu0 0
        %813 = vmatprep.subr.bf16.mxu0 0
        %814 = vmatpush1.bf16.msra.mxu0 0
        %815 = vmatprep.subr.bf16.mxu0 0
        %816 = vmatpush1.bf16.msra.mxu0 0
        %817 = vmatprep.subr.bf16.mxu0 0
        %818 = vmatpush1.bf16.msra.mxu0 0
        %819 = vmatprep.subr.bf16.mxu0 0
        %820 = vmatpush1.bf16.msra.mxu0 0
        %821 = vmatprep.subr.bf16.mxu0 0
        %822 = vmatpush1.bf16.msra.mxu0 0
        %823 = vmatprep.subr.bf16.mxu0 0
        %824 = vmatpush1.bf16.msra.mxu0 0
        %825 = vmatprep.subr.bf16.mxu0 0
        %826 = vmatpush1.bf16.msra.mxu0 0
        %827 = vmatprep.subr.bf16.mxu0 0
        %828 = vmatpush1.bf16.msra.mxu0 0
        %829 = vmatprep.subr.bf16.mxu0 0
        %830 = vmatpush1.bf16.msra.mxu0 0
        %831 = vmatprep.subr.bf16.mxu0 0
        %832 = vmatpush1.bf16.msra.mxu0 0
        %833 = vmatprep.subr.bf16.mxu0 0
        %834 = vmatpush1.bf16.msra.mxu0 0
        %835 = vmatprep.subr.bf16.mxu0 0
        %836 = vmatpush1.bf16.msra.mxu0 0
        %837 = vmatprep.mubr.bf16.mxu0 0
        %838 = vmatmul.mubr.bf16.gmra.mrb[0].mxu0 %v800
        %v839 = vpop.f32.mrb[0].mxu0
        %v840 = vadd.f32 0.0, %v839
        %v841 = vpop.f32.mrb[0].mxu0
        %v842 = vpop.f32.mrb[0].mxu0
        %v843 = vpop.f32.mrb[0].mxu0
        %844 = vdwg.mxu0
        %846 = vrot.lane.b32.xlu0 %v744, 8
        %v847 = vpop.permute.xlu0 %846
        %850 = vrot.lane.b32.xlu0 %v792, 16
        %v851 = vpop.permute.xlu0 %850
        %854 = vrot.lane.b32.xlu0 %v840, 24
        %v855 = vpop.permute.xlu0 %854
        %v857 = vsel %vm410, %v696, %v847
        %vm858 = vcmask 130048
        %v859 = vsel %vm858, %v857, %v851
        %vm860 = vcmask 195584
        %v861 = vsel %vm860, %v859, %v855
        %v862 = vpack.c.bf16 %v861, %v861
        %v863 = vld [vmem:[#allocation7] sm:$0xf]
        %v864 = vld [vmem:[#allocation7 + $0x4] sm:$0xf]
        %v865 = vld [vmem:[#allocation7 + $0x8] sm:$0xf]
        %v866 = vld [vmem:[#allocation7 + $0xc] sm:$0xf]
        %v867 = vld [vmem:[%s4] sm:$0x1]
        %v869 = vlaneseq
        %v870 = vshrl.u32 %v869, 7
        %v871 = vsub.s32 0, %v870
        %v872 = vrot.slane %v867, %v871
        %v878 = vunpack.c.l.b16 %v863
        %v879 = vunpack.c.l.b16 %v864
        %v880 = vunpack.c.l.b16 %v865
        %v881 = vunpack.c.l.b16 %v866
        %v882 = vpack.c.b16 %v879, %v878
        %v883 = vpack.c.b16 %v881, %v880
        %v887 = vsel %vm349, %v862, 0
        %889 = vmatprep.subr.bf16.mxu0 0
        %890 = vmatpush1.bf16.msra.mxu0 %v882
        %891 = vmatprep.subr.bf16.mxu0 0
        %892 = vmatpush1.bf16.msra.mxu0 %v883
        %893 = vmatprep.subr.bf16.mxu0 0
        %894 = vmatpush1.bf16.msra.mxu0 0
        %895 = vmatprep.subr.bf16.mxu0 0
        %896 = vmatpush1.bf16.msra.mxu0 0
        %897 = vmatprep.subr.bf16.mxu0 0
        %898 = vmatpush1.bf16.msra.mxu0 0
        %899 = vmatprep.subr.bf16.mxu0 0
        %900 = vmatpush1.bf16.msra.mxu0 0
        %901 = vmatprep.subr.bf16.mxu0 0
        %902 = vmatpush1.bf16.msra.mxu0 0
        %903 = vmatprep.subr.bf16.mxu0 0
        %904 = vmatpush1.bf16.msra.mxu0 0
        %905 = vmatprep.subr.bf16.mxu0 0
        %906 = vmatpush1.bf16.msra.mxu0 0
        %907 = vmatprep.subr.bf16.mxu0 0
        %908 = vmatpush1.bf16.msra.mxu0 0
        %909 = vmatprep.subr.bf16.mxu0 0
        %910 = vmatpush1.bf16.msra.mxu0 0
        %911 = vmatprep.subr.bf16.mxu0 0
        %912 = vmatpush1.bf16.msra.mxu0 0
        %913 = vmatprep.subr.bf16.mxu0 0
        %914 = vmatpush1.bf16.msra.mxu0 0
        %915 = vmatprep.subr.bf16.mxu0 0
        %916 = vmatpush1.bf16.msra.mxu0 0
        %917 = vmatprep.subr.bf16.mxu0 0
        %918 = vmatpush1.bf16.msra.mxu0 0
        %919 = vmatprep.subr.bf16.mxu0 0
        %920 = vmatpush1.bf16.msra.mxu0 0
        %921 = vmatprep.mubr.bf16.mxu0 0
        %922 = vmatmul.mubr.bf16.gmra.mrb[0].mxu0 %v887
        %v923 = vpop.f32.mrb[0].mxu0
        %v924 = vadd.f32 %v872, %v923
        %v925 = vpop.f32.mrb[0].mxu0
        %v926 = vpop.f32.mrb[0].mxu0
        %v927 = vpop.f32.mrb[0].mxu0
        %928 = vdwg.mxu0
        %v929 = vpack.c.bf16 %v924, %v924
        %v930 = vld [vmem:[%s5] sm:$0xf]
        %v931 = vld [vmem:[%s5 + $0x4] sm:$0xf]
        %v932 = vld [vmem:[%s5 + $0x8] sm:$0xf]
        %v933 = vld [vmem:[%s5 + $0xc] sm:$0xf]
        %v934 = vld [vmem:[%s6] sm:$0x1]
        %v936 = vlaneseq
        %v937 = vshrl.u32 %v936, 7
        %v938 = vsub.s32 0, %v937
        %v939 = vrot.slane %v934, %v938
        %v945 = vunpack.c.l.b16 %v930
        %v946 = vunpack.c.l.b16 %v931
        %v947 = vunpack.c.l.b16 %v932
        %v948 = vunpack.c.l.b16 %v933
        %v949 = vpack.c.b16 %v946, %v945
        %v950 = vpack.c.b16 %v948, %v947
        %v954 = vsel %vm349, %v929, 0
        %956 = vmatprep.subr.bf16.mxu0 0
        %957 = vmatpush1.bf16.msra.mxu0 %v949
        %958 = vmatprep.subr.bf16.mxu0 0
        %959 = vmatpush1.bf16.msra.mxu0 %v950
        %960 = vmatprep.subr.bf16.mxu0 0
        %961 = vmatpush1.bf16.msra.mxu0 0
        %962 = vmatprep.subr.bf16.mxu0 0
        %963 = vmatpush1.bf16.msra.mxu0 0
        %964 = vmatprep.subr.bf16.mxu0 0
        %965 = vmatpush1.bf16.msra.mxu0 0
        %966 = vmatprep.subr.bf16.mxu0 0
        %967 = vmatpush1.bf16.msra.mxu0 0
        %968 = vmatprep.subr.bf16.mxu0 0
        %969 = vmatpush1.bf16.msra.mxu0 0
        %970 = vmatprep.subr.bf16.mxu0 0
        %971 = vmatpush1.bf16.msra.mxu0 0
        %972 = vmatprep.subr.bf16.mxu0 0
        %973 = vmatpush1.bf16.msra.mxu0 0
        %974 = vmatprep.subr.bf16.mxu0 0
        %975 = vmatpush1.bf16.msra.mxu0 0
        %976 = vmatprep.subr.bf16.mxu0 0
        %977 = vmatpush1.bf16.msra.mxu0 0
        %978 = vmatprep.subr.bf16.mxu0 0
        %979 = vmatpush1.bf16.msra.mxu0 0
        %980 = vmatprep.subr.bf16.mxu0 0
        %981 = vmatpush1.bf16.msra.mxu0 0
        %982 = vmatprep.subr.bf16.mxu0 0
        %983 = vmatpush1.bf16.msra.mxu0 0
        %984 = vmatprep.subr.bf16.mxu0 0
        %985 = vmatpush1.bf16.msra.mxu0 0
        %986 = vmatprep.subr.bf16.mxu0 0
        %987 = vmatpush1.bf16.msra.mxu0 0
        %988 = vmatprep.mubr.bf16.mxu0 0
        %989 = vmatmul.mubr.bf16.gmra.mrb[0].mxu0 %v954
        %v990 = vpop.f32.mrb[0].mxu0
        %v991 = vadd.f32 %v939, %v990
        %v992 = vpop.f32.mrb[0].mxu0
        %v993 = vpop.f32.mrb[0].mxu0
        %v994 = vpop.f32.mrb[0].mxu0
        %995 = vdwg.mxu0
        %996 = vst [vmem:[%s322] sm:$0xff] %v991
        %s997 = sand.u32 %s185, 1
        %s998 = scalar_lea.sflag [#allocation4], %s997
        %s999 = sand.u32 %s185, 1
        %s1000 = smul.addr %s999, 8
        %s1001 = scalar_lea.vmem [#allocation8], %s1000
        // Predicated region
        $region61: #{tpu_custom_call.1} parent=47 // pred_check
          %p1002 = pneg %p195
        $region62: #{tpu_custom_call.1} parent=47 // pred_check_branch
          %1004 = sbr.rel (%p1002) target = $region64
        $region63: #{tpu_custom_call.1} parent=47 // pred_region
          %s1006 = ssub.s32 128, 128
          %1007 = vsyncadd %s998, %s1006
          %s1008 = smul.addr %s25, 128
          %s1009 = scalar_lea.hbm %s7, %s1008
          %s1011 = sshll.u32 %s1001, 4
          %s1012 = int_to_ptr.vmem [resolvable:$true] %s1011
          %1014 = dma.vmem_to_hbm [thread:$0]  %s1012, 128, %s1009, %s998
        $region64: #{tpu_custom_call.1} parent=47 // pred_fallthru
          _
      $region48: #{tpu_custom_call.1} parent=5 // pred_fallthru
        _
      %p1015 = scmp.le.s32.totalorder 2, %s20
      // Predicated region
      $region65: #{tpu_custom_call.1} parent=5 // pred_check
        %p1016 = pneg %p1015
      $region66: #{tpu_custom_call.1} parent=5 // pred_check_branch
        %1018 = sbr.rel (%p1016) target = $region68
      $region67: #{tpu_custom_call.1} parent=5 // pred_region
        %s1019 = ssub.s32 %s20, 2
        // Predicated region
        $region69: #{tpu_custom_call.1} parent=67 // pred_check
          %p1020 = pneg %p201
        $region70: #{tpu_custom_call.1} parent=67 // pred_check_branch
          %1022 = sbr.rel (%p1020) target = $region72
        $region71: #{tpu_custom_call.1} parent=67 // pred_region
          %s1023 = sand.u32 %s186, 1
          %s1024 = scalar_lea.sflag [#allocation4], %s1023
          %s1025 = sand.u32 %s186, 1
          %s1026 = smul.addr %s1025, 8
          %s1027 = scalar_lea.vmem [#allocation8], %s1026
          %1028 = dma.done %s1024, 128
        $region72: #{tpu_custom_call.1} parent=67 // pred_fallthru
          _
      $region68: #{tpu_custom_call.1} parent=5 // pred_fallthru
        _
    $region6: #{tpu_custom_call.1} parent=1 // loop_footer
      %s24 = sadd.s32 1, %s20
    $region7: #{tpu_custom_call.1} parent=1 // loop_footer_branch
      %19 = sbr.rel target = $region3
    $region8: #{tpu_custom_call.1} parent=1 // loop_exit
      _
    %1029 = vsyncpa [#allocation3], 1
    %s1030 = scalar_lea.sflag [#allocation3], 1
    %1031 = vsyncpa %s1030, 1
    %1032 = vsyncpa [#allocation6], 1
    %1033 = vsyncpa [#allocation4], 1
    %s1034 = scalar_lea.sflag [#allocation4], 1
    %1035 = vsyncpa %s1034, 1

</llo_original>
